<compile_context>
chip_gen: v7x
topology: tpu7x:2x2x1
jax: 0.10.0
libtpu: 0.0.40
codegen_flags: <defaults>
</compile_context>

<pallas_src>
import functools

import jax
import jax.numpy as jnp
from jax.experimental import pallas as pl
from jax.experimental.pallas import tpu as pltpu

LEAKY_SLOPE = 0.01
BN_EPS = 1e-5
CBAM_REDUCTION = 16

_VMEM = pl.BlockSpec(memory_space=pltpu.MemorySpace.VMEM)
_SMEM = pl.BlockSpec(memory_space=pltpu.MemorySpace.SMEM)


def _ginn3_kernel(x_ref, w1_ref, l1v_ref, l1m_ref, w2p_ref, l2v_ref, g_ref,
                  sc_ref, o_ref, *, out1, out2):
    """Fully fused GINN3 forward (eval mode), single VMEM-resident block.

    x_ref   (B, in1)        input
    w1_ref  (in1, out1)     layer-1 linear weight, (in, out) layout
    l1v_ref (16, out1)      row0 bias1, row1 bm2_1, rows 2..9 wm2_1 (8-padded)
    l1m_ref (64, 8)         rows 0..out1-1 = wm1_1^T (8-lane padded),
                            row out1 = bm1_1 (8-lane padded)
    w2p_ref (B, out1, B*out2)  layer-2 weight with reshape(60,-1).t() folded in
    l2v_ref (8, B*out2)     row0 bias2, row1 wm1_2, row2 wm2_2, row3 bm2_2
                            (each tiled B times along lanes)
    g_ref   (B*out2, out2)  gather matrix  G[l, o] = (l % out2 == o)
    sc_ref  (16,) SMEM      [0..3]  l1 conv-max/mean taps, BN scale/shift
                            [4]     l2 MLP hidden bias
                            [5..8]  l2 conv-max/mean taps, BN scale/shift
    o_ref   (B, out2)       output
    """
    B = x_ref.shape[0]
    sc = sc_ref  # 1-D SMEM scalars

    # ---------------- layer 1: Linear -> CBAM -> leaky_relu ----------------
    x = x_ref[...]                                            # (B, in1)
    l1v = l1v_ref[...]                                        # (16, out1)
    l1m = l1m_ref[...]                                        # (64, 8)

    z1 = jnp.dot(x, w1_ref[...], preferred_element_type=jnp.float32)
    z1 = z1 + l1v[0:1, :]                                     # + bias1

    # ChannelGate: avg == max == lse pool of a 1x1 map -> att = 3 * mlp(z1).
    # The tiny MLP runs on the MXU (hidden width padded to 8 lanes).
    h1 = jnp.dot(z1, l1m[0:out1, :], preferred_element_type=jnp.float32)
    h1 = jnp.maximum(h1 + l1m[out1:out1 + 1, :], 0.0)         # (B, 8) ReLU
    att1 = l1v[1:2, :] + jnp.dot(h1, l1v[2:10, :],
                                 preferred_element_type=jnp.float32)
    y1 = z1 * jax.nn.sigmoid(3.0 * att1)

    # SpatialGate: ChannelPool(max, mean) -> 7x7-conv centre taps -> BN -> sig.
    mx1 = jnp.max(y1, axis=1, keepdims=True)
    mn1 = jnp.sum(y1, axis=1, keepdims=True) * (1.0 / out1)
    g1 = (mx1 * sc[0] + mn1 * sc[1]) * sc[2] + sc[3]
    y1 = y1 * jax.nn.sigmoid(g1)
    y1 = jnp.where(y1 >= 0.0, y1, LEAKY_SLOPE * y1)           # leaky_relu

    # -------- layer 2 on the host-folded reshape(60,-1).t() permutation -----
    l2v = l2v_ref[...]                                        # (8, B*out2)
    z2f = l2v[0:1, :]                                         # bias2, flat
    for b in range(B):                                        # B tiny, static
        z2f = z2f + jnp.dot(y1[b:b + 1, :], w2p_ref[b],
                            preferred_element_type=jnp.float32)

    # Segment mask: flat lane i*out2+o belongs to output batch row i.
    lane = jax.lax.broadcasted_iota(jnp.int32, (B, B * out2), 1)
    sub = jax.lax.broadcasted_iota(jnp.int32, (B, B * out2), 0)
    d = lane - out2 * sub
    inseg = (d >= 0) & (d < out2)
    z2 = jnp.where(inseg, z2f, 0.0)                           # (B, B*out2)

    # ChannelGate (hidden width 1): per-segment lane reduction.
    h2 = jnp.sum(z2 * l2v[1:2, :], axis=1, keepdims=True) + sc[4]
    h2 = jnp.maximum(h2, 0.0)                                 # (B, 1)
    att2 = l2v[3:4, :] + h2 * l2v[2:3, :]
    y2 = z2 * jax.nn.sigmoid(3.0 * att2)                      # zeros stay zero

    # SpatialGate, per segment.
    mx2 = jnp.max(jnp.where(inseg, y2, -jnp.inf), axis=1, keepdims=True)
    mn2 = jnp.sum(y2, axis=1, keepdims=True) * (1.0 / out2)
    g2 = (mx2 * sc[5] + mn2 * sc[6]) * sc[7] + sc[8]
    y2 = y2 * jax.nn.sigmoid(g2)
    y2 = jnp.where(y2 >= 0.0, y2, LEAKY_SLOPE * y2)           # leaky_relu

    # Gather each row's own segment back to (B, out2): one small MXU matmul.
    o_ref[...] = jnp.dot(y2, g_ref[...], preferred_element_type=jnp.float32)


def ginn3_forward(x, ops):
    """x: (B, 120) -> (B, 30). Matches GINN3.forward in eval mode."""
    B = x.shape[0]
    out1 = ops["w1"].shape[1]
    out2 = ops["gmat"].shape[1]
    kernel = functools.partial(_ginn3_kernel, out1=out1, out2=out2)
    # Single call, no grid: everything fits one VMEM block (~540 KB).
    # TODO(synk): if batch grows to hundreds of rows, add a parallel batch grid
    # axis (dimension_semantics=("parallel",)) so both v7x TensorCores are used.
    return pl.pallas_call(
        kernel,
        out_shape=jax.ShapeDtypeStruct((B, out2), jnp.float32),
        in_specs=[_VMEM] * 7 + [_SMEM],
        out_specs=_VMEM,
    )(x, ops["w1"], ops["l1v"], ops["l1m"], ops["w2p"], ops["l2v"],
      ops["gmat"], ops["sc"])


def init_linear_cbam_raw(key, in_f, out_f):
    """Deterministic init in the PyTorch layouts (weight = (out, in))."""
    hid = max(out_f // CBAM_REDUCTION, 1)
    ks = jax.random.split(key, 7)

    def uni(k, shape, fan_in):
        bound = 1.0 / float(fan_in) ** 0.5
        return jax.random.uniform(k, shape, jnp.float32, -bound, bound)

    return {
        "w": uni(ks[0], (out_f, in_f), in_f),          # nn.Linear weight
        "b": uni(ks[1], (out_f,), in_f),               # nn.Linear bias
        "wm1": uni(ks[2], (hid, out_f), out_f),        # ChannelGate mlp[1]
        "bm1": uni(ks[3], (hid,), out_f),
        "wm2": uni(ks[4], (out_f, hid), hid),          # ChannelGate mlp[3]
        "bm2": uni(ks[5], (out_f,), hid),
        "conv_w": uni(ks[6], (1, 2, 7, 7), 2 * 7 * 7),  # SpatialGate conv
    }


def pack_ginn3_params(p1, p2, batch):
    """Pack raw params into the fused kernel's operands (fold the permutation)."""
    B = batch
    out1, in1 = p1["w"].shape
    out2, in2 = p2["w"].shape
    hid1 = p1["wm1"].shape[0]
    hid2 = p2["wm1"].shape[0]
    assert in2 == out1, "layer-2 input width must equal layer-1 output width"
    assert out1 + 1 <= 64, "l1m packing assumes out1 < 64"
    assert hid1 <= 8, "layer-1 ChannelGate hidden width must fit 8-lane packing"
    assert hid2 == 1, "layer-2 flat CBAM packing assumes hidden width 1"

    # BatchNorm2d(1) eval-mode defaults (mean=0, var=1, gamma=1, beta=0), folded.
    # TODO(synk): fold real running stats / affine params here if trained
    # weights are ever loaded.
    bn_scale = (1.0 + BN_EPS) ** -0.5
    bn_shift = 0.0

    # Layer-1 linear weight in (in, out).
    w1 = p1["w"].T

    # Layer-1 packed lane vectors (width out1).
    l1v = jnp.zeros((16, out1), jnp.float32)
    l1v = l1v.at[0].set(p1["b"])
    l1v = l1v.at[1].set(p1["bm2"])
    l1v = l1v.at[2:2 + hid1].set(p1["wm2"].T)          # row 2+j = wm2[:, j]

    # Layer-1 ChannelGate MLP first matmul operand: rows 0..out1-1 = wm1^T,
    # row out1 = bm1 (hidden width padded to 8 lanes with zeros).
    l1m = jnp.zeros((64, 8), jnp.float32)
    l1m = l1m.at[0:out1, 0:hid1].set(p1["wm1"].T)
    l1m = l1m.at[out1, 0:hid1].set(p1["bm1"])

    # Fold the PyTorch reshape(out1, -1).t() permutation into the layer-2
    # weight:  z2[i, o] = sum_{f: f % B == i} y1_flat[f] * W2[f // B, o]
    # so  W2p[b, c, i*out2 + o] = [ (b*out1+c) % B == i ] * W2[(b*out1+c)//B, o].
    w2 = p2["w"].T                                      # (in2, out2)
    f = jnp.arange(B * out1)
    onehot = jax.nn.one_hot(f % B, B, dtype=jnp.float32)        # (B*out1, B)
    w2rows = w2[f // B]                                          # (B*out1, out2)
    w2p = (onehot[:, :, None] * w2rows[:, None, :]).reshape(B * out1, B * out2)
    w2p = w2p.reshape(B, out1, B * out2)

    # Layer-2 packed flat lane vectors (width B*out2), each tiled B times.
    l2v = jnp.zeros((8, B * out2), jnp.float32)
    l2v = l2v.at[0].set(jnp.tile(p2["b"], B))
    l2v = l2v.at[1].set(jnp.tile(p2["wm1"][0], B))
    l2v = l2v.at[2].set(jnp.tile(p2["wm2"][:, 0], B))
    l2v = l2v.at[3].set(jnp.tile(p2["bm2"], B))

    # Gather matrix: out[i, o] = y2_masked[i, i*out2 + o].
    gmat = jax.nn.one_hot(jnp.arange(B * out2) % out2, out2, dtype=jnp.float32)

    # 1-D scalar operand for SMEM (a 2-D [1,8] SMEM ref would pad to [8,128]).
    sc = jnp.array(
        [p1["conv_w"][0, 0, 3, 3], p1["conv_w"][0, 1, 3, 3], bn_scale, bn_shift,
         p2["bm1"][0],
         p2["conv_w"][0, 0, 3, 3], p2["conv_w"][0, 1, 3, 3], bn_scale, bn_shift,
         0.0, 0.0, 0.0, 0.0, 0.0, 0.0, 0.0],
        dtype=jnp.float32)

    return {"w1": w1, "l1v": l1v, "l1m": l1m, "w2p": w2p, "l2v": l2v,
            "gmat": gmat, "sc": sc}


def _reference_forward(x, p1, p2):
    """Pure-JAX reference from the RAW (unpacked) params, mirroring PyTorch."""
    def linear_cbam(xin, p):
        z = xin @ p["w"].T + p["b"]
        # ChannelGate: avg == max == lse pool on a 1x1 map -> 3 * mlp(z).
        h = jnp.maximum(z @ p["wm1"].T + p["bm1"], 0.0)
        att = h @ p["wm2"].T + p["bm2"]
        y = z * jax.nn.sigmoid(3.0 * att)
        # SpatialGate: only the 7x7 conv's centre taps see a 1x1 map.
        mx = jnp.max(y, axis=1, keepdims=True)
        mn = jnp.mean(y, axis=1, keepdims=True)
        conv = mx * p["conv_w"][0, 0, 3, 3] + mn * p["conv_w"][0, 1, 3, 3]
        bn = conv * (1.0 + BN_EPS) ** -0.5
        y = y * jax.nn.sigmoid(bn)
        return jnp.where(y >= 0.0, y, LEAKY_SLOPE * y)  # GINN3's leaky_relu

    y = linear_cbam(x, p1)
    y = y.reshape(p1["w"].shape[0], -1).T               # reshape(60, -1).t()
    return linear_cbam(y, p2)


if __name__ == "__main__":
    key = jax.random.PRNGKey(0)
    kx, k1, k2 = jax.random.split(key, 3)

    B = 8
    x = jax.random.normal(kx, (B, 120), dtype=jnp.float32)

    # TODO(synk): Dropout (p=0.25 / p=0.02) is identity in eval mode; training-
    # mode stochastic dropout / batch-stat BatchNorm is not implemented in-kernel.
    raw1 = init_linear_cbam_raw(k1, in_f=120, out_f=60)   # l1: 120 -> 60, hid 3
    raw2 = init_linear_cbam_raw(k2, in_f=60, out_f=30)    # l2:  60 -> 30, hid 1
    ops = pack_ginn3_params(raw1, raw2, batch=B)

    fwd = jax.jit(ginn3_forward)
    out = jax.block_until_ready(fwd(x, ops))

    assert out.shape == (B, 30), out.shape
    assert out.dtype == jnp.float32
    assert bool(jnp.all(jnp.isfinite(out)))

    ref = jax.block_until_ready(_reference_forward(x, raw1, raw2))
    assert bool(jnp.allclose(out, ref, rtol=2e-2, atol=2e-2)), (
        float(jnp.max(jnp.abs(out - ref))))

    print("KERNEL_OK")
</pallas_src>

<mosaic_0001>
module attributes {stable_mosaic.version = 11 : i64} {
  func.func @_ginn3_kernel(%arg0: memref<8x120xf32, #tpu.memory_space<vmem>>, %arg1: memref<120x60xf32, #tpu.memory_space<vmem>>, %arg2: memref<16x60xf32, #tpu.memory_space<vmem>>, %arg3: memref<64x8xf32, #tpu.memory_space<vmem>>, %arg4: memref<8x60x240xf32, #tpu.memory_space<vmem>>, %arg5: memref<8x240xf32, #tpu.memory_space<vmem>>, %arg6: memref<240x30xf32, #tpu.memory_space<vmem>>, %arg7: memref<16xf32, #tpu.memory_space<smem>>, %arg8: memref<8x30xf32, #tpu.memory_space<vmem>>) attributes {dimension_semantics = [], scalar_prefetch = 0 : i64, scratch_operands = 0 : i64, tpu.core_type = #tpu.core_type<tc>} {
    %c0 = arith.constant 0 : index
    %c0_0 = arith.constant 0 : index
    %0 = vector.load %arg0[%c0, %c0_0] : memref<8x120xf32, #tpu.memory_space<vmem>>, vector<8x120xf32>
    %c0_1 = arith.constant 0 : index
    %c0_2 = arith.constant 0 : index
    %1 = vector.load %arg2[%c0_1, %c0_2] : memref<16x60xf32, #tpu.memory_space<vmem>>, vector<16x60xf32>
    %c0_3 = arith.constant 0 : index
    %c0_4 = arith.constant 0 : index
    %2 = vector.load %arg3[%c0_3, %c0_4] : memref<64x8xf32, #tpu.memory_space<vmem>>, vector<64x8xf32>
    %c0_5 = arith.constant 0 : index
    %c0_6 = arith.constant 0 : index
    %3 = vector.load %arg1[%c0_5, %c0_6] : memref<120x60xf32, #tpu.memory_space<vmem>>, vector<120x60xf32>
    %cst = arith.constant dense<0.000000e+00> : vector<8x60xf32>
    %4 = tpu.matmul %0, %3, %cst {dimension_numbers = #tpu.dot_dimension_numbers<[1], [0], [0], [1], [0, 0, 1, 1], [], []>} : vector<8x120xf32>, vector<120x60xf32>, vector<8x60xf32> -> vector<8x60xf32>
    %5 = vector.extract_strided_slice %1 {offsets = [0, 0], sizes = [1, 60], strides = [1, 1]} : vector<16x60xf32> to vector<1x60xf32>
    %6 = vector.broadcast %5 : vector<1x60xf32> to vector<8x60xf32>
    %7 = arith.addf %4, %6 : vector<8x60xf32>
    %8 = vector.extract_strided_slice %2 {offsets = [0, 0], sizes = [60, 8], strides = [1, 1]} : vector<64x8xf32> to vector<60x8xf32>
    %cst_7 = arith.constant dense<0.000000e+00> : vector<8x8xf32>
    %9 = tpu.matmul %7, %8, %cst_7 {dimension_numbers = #tpu.dot_dimension_numbers<[1], [0], [0], [1], [0, 0, 1, 1], [], []>} : vector<8x60xf32>, vector<60x8xf32>, vector<8x8xf32> -> vector<8x8xf32>
    %10 = vector.extract_strided_slice %2 {offsets = [60, 0], sizes = [1, 8], strides = [1, 1]} : vector<64x8xf32> to vector<1x8xf32>
    %11 = vector.broadcast %10 : vector<1x8xf32> to vector<8x8xf32>
    %12 = arith.addf %9, %11 : vector<8x8xf32>
    %cst_8 = arith.constant 0.000000e+00 : f32
    %13 = vector.broadcast %cst_8 : f32 to vector<8x8xf32>
    %14 = arith.maximumf %12, %13 : vector<8x8xf32>
    %15 = vector.extract_strided_slice %1 {offsets = [1, 0], sizes = [1, 60], strides = [1, 1]} : vector<16x60xf32> to vector<1x60xf32>
    %16 = vector.extract_strided_slice %1 {offsets = [2, 0], sizes = [8, 60], strides = [1, 1]} : vector<16x60xf32> to vector<8x60xf32>
    %cst_9 = arith.constant dense<0.000000e+00> : vector<8x60xf32>
    %17 = tpu.matmul %14, %16, %cst_9 {dimension_numbers = #tpu.dot_dimension_numbers<[1], [0], [0], [1], [0, 0, 1, 1], [], []>} : vector<8x8xf32>, vector<8x60xf32>, vector<8x60xf32> -> vector<8x60xf32>
    %18 = vector.broadcast %15 : vector<1x60xf32> to vector<8x60xf32>
    %19 = arith.addf %18, %17 : vector<8x60xf32>
    %cst_10 = arith.constant 3.000000e+00 : f32
    %20 = vector.broadcast %cst_10 : f32 to vector<8x60xf32>
    %21 = arith.mulf %20, %19 : vector<8x60xf32>
    %22 = arith.negf %21 : vector<8x60xf32>
    %23 = math.exp %22 : vector<8x60xf32>
    %cst_11 = arith.constant 1.000000e+00 : f32
    %24 = vector.broadcast %cst_11 : f32 to vector<8x60xf32>
    %25 = arith.addf %24, %23 : vector<8x60xf32>
    %26 = arith.divf %24, %25 : vector<8x60xf32>
    %27 = arith.mulf %7, %26 : vector<8x60xf32>
    %cst_12 = arith.constant dense<0xFF800000> : vector<8xf32>
    %28 = vector.multi_reduction <maximumf>, %27, %cst_12 [1] : vector<8x60xf32> to vector<8xf32>
    %29 = vector.shape_cast %28 : vector<8xf32> to vector<8x1xf32>
    %cst_13 = arith.constant dense<0.000000e+00> : vector<8xf32>
    %30 = vector.multi_reduction <add>, %27, %cst_13 [1] : vector<8x60xf32> to vector<8xf32>
    %31 = vector.shape_cast %30 : vector<8xf32> to vector<8x1xf32>
    %cst_14 = arith.constant 0.0166666675 : f32
    %32 = vector.broadcast %cst_14 : f32 to vector<8x1xf32>
    %33 = arith.mulf %31, %32 : vector<8x1xf32>
    %c0_15 = arith.constant 0 : index
    %34 = memref.load %arg7[%c0_15] : memref<16xf32, #tpu.memory_space<smem>>
    %35 = vector.broadcast %34 : f32 to vector<8x1xf32>
    %36 = arith.mulf %29, %35 : vector<8x1xf32>
    %c1 = arith.constant 1 : index
    %37 = memref.load %arg7[%c1] : memref<16xf32, #tpu.memory_space<smem>>
    %38 = vector.broadcast %37 : f32 to vector<8x1xf32>
    %39 = arith.mulf %33, %38 : vector<8x1xf32>
    %40 = arith.addf %36, %39 : vector<8x1xf32>
    %c2 = arith.constant 2 : index
    %41 = memref.load %arg7[%c2] : memref<16xf32, #tpu.memory_space<smem>>
    %42 = vector.broadcast %41 : f32 to vector<8x1xf32>
    %43 = arith.mulf %40, %42 : vector<8x1xf32>
    %c3 = arith.constant 3 : index
    %44 = memref.load %arg7[%c3] : memref<16xf32, #tpu.memory_space<smem>>
    %45 = vector.broadcast %44 : f32 to vector<8x1xf32>
    %46 = arith.addf %43, %45 : vector<8x1xf32>
    %47 = arith.negf %46 : vector<8x1xf32>
    %48 = math.exp %47 : vector<8x1xf32>
    %cst_16 = arith.constant 1.000000e+00 : f32
    %49 = vector.broadcast %cst_16 : f32 to vector<8x1xf32>
    %50 = arith.addf %49, %48 : vector<8x1xf32>
    %51 = arith.divf %49, %50 : vector<8x1xf32>
    %52 = vector.broadcast %51 : vector<8x1xf32> to vector<8x60xf32>
    %53 = arith.mulf %27, %52 : vector<8x60xf32>
    %cst_17 = arith.constant 0.000000e+00 : f32
    %54 = vector.broadcast %cst_17 : f32 to vector<8x60xf32>
    %55 = arith.cmpf oge, %53, %54 : vector<8x60xf32>
    %cst_18 = arith.constant 0.00999999977 : f32
    %56 = vector.broadcast %cst_18 : f32 to vector<8x60xf32>
    %57 = arith.mulf %56, %53 : vector<8x60xf32>
    %58 = arith.select %55, %53, %57 : vector<8x60xi1>, vector<8x60xf32>
    %c0_19 = arith.constant 0 : index
    %c0_20 = arith.constant 0 : index
    %59 = vector.load %arg5[%c0_19, %c0_20] : memref<8x240xf32, #tpu.memory_space<vmem>>, vector<8x240xf32>
    %60 = vector.extract_strided_slice %59 {offsets = [0, 0], sizes = [1, 240], strides = [1, 1]} : vector<8x240xf32> to vector<1x240xf32>
    %61 = vector.extract_strided_slice %58 {offsets = [0, 0], sizes = [1, 60], strides = [1, 1]} : vector<8x60xf32> to vector<1x60xf32>
    %c0_21 = arith.constant 0 : index
    %c0_22 = arith.constant 0 : index
    %c0_23 = arith.constant 0 : index
    %62 = vector.load %arg4[%c0_21, %c0_22, %c0_23] : memref<8x60x240xf32, #tpu.memory_space<vmem>>, vector<1x60x240xf32>
    %63 = vector.shape_cast %62 : vector<1x60x240xf32> to vector<60x240xf32>
    %cst_24 = arith.constant dense<0.000000e+00> : vector<1x240xf32>
    %64 = tpu.matmul %61, %63, %cst_24 {dimension_numbers = #tpu.dot_dimension_numbers<[1], [0], [0], [1], [0, 0, 1, 1], [], []>} : vector<1x60xf32>, vector<60x240xf32>, vector<1x240xf32> -> vector<1x240xf32>
    %65 = arith.addf %60, %64 : vector<1x240xf32>
    %66 = vector.extract_strided_slice %58 {offsets = [1, 0], sizes = [1, 60], strides = [1, 1]} : vector<8x60xf32> to vector<1x60xf32>
    %c1_25 = arith.constant 1 : index
    %c0_26 = arith.constant 0 : index
    %c0_27 = arith.constant 0 : index
    %67 = vector.load %arg4[%c1_25, %c0_26, %c0_27] : memref<8x60x240xf32, #tpu.memory_space<vmem>>, vector<1x60x240xf32>
    %68 = vector.shape_cast %67 : vector<1x60x240xf32> to vector<60x240xf32>
    %cst_28 = arith.constant dense<0.000000e+00> : vector<1x240xf32>
    %69 = tpu.matmul %66, %68, %cst_28 {dimension_numbers = #tpu.dot_dimension_numbers<[1], [0], [0], [1], [0, 0, 1, 1], [], []>} : vector<1x60xf32>, vector<60x240xf32>, vector<1x240xf32> -> vector<1x240xf32>
    %70 = arith.addf %65, %69 : vector<1x240xf32>
    %71 = vector.extract_strided_slice %58 {offsets = [2, 0], sizes = [1, 60], strides = [1, 1]} : vector<8x60xf32> to vector<1x60xf32>
    %c2_29 = arith.constant 2 : index
    %c0_30 = arith.constant 0 : index
    %c0_31 = arith.constant 0 : index
    %72 = vector.load %arg4[%c2_29, %c0_30, %c0_31] : memref<8x60x240xf32, #tpu.memory_space<vmem>>, vector<1x60x240xf32>
    %73 = vector.shape_cast %72 : vector<1x60x240xf32> to vector<60x240xf32>
    %cst_32 = arith.constant dense<0.000000e+00> : vector<1x240xf32>
    %74 = tpu.matmul %71, %73, %cst_32 {dimension_numbers = #tpu.dot_dimension_numbers<[1], [0], [0], [1], [0, 0, 1, 1], [], []>} : vector<1x60xf32>, vector<60x240xf32>, vector<1x240xf32> -> vector<1x240xf32>
    %75 = arith.addf %70, %74 : vector<1x240xf32>
    %76 = vector.extract_strided_slice %58 {offsets = [3, 0], sizes = [1, 60], strides = [1, 1]} : vector<8x60xf32> to vector<1x60xf32>
    %c3_33 = arith.constant 3 : index
    %c0_34 = arith.constant 0 : index
    %c0_35 = arith.constant 0 : index
    %77 = vector.load %arg4[%c3_33, %c0_34, %c0_35] : memref<8x60x240xf32, #tpu.memory_space<vmem>>, vector<1x60x240xf32>
    %78 = vector.shape_cast %77 : vector<1x60x240xf32> to vector<60x240xf32>
    %cst_36 = arith.constant dense<0.000000e+00> : vector<1x240xf32>
    %79 = tpu.matmul %76, %78, %cst_36 {dimension_numbers = #tpu.dot_dimension_numbers<[1], [0], [0], [1], [0, 0, 1, 1], [], []>} : vector<1x60xf32>, vector<60x240xf32>, vector<1x240xf32> -> vector<1x240xf32>
    %80 = arith.addf %75, %79 : vector<1x240xf32>
    %81 = vector.extract_strided_slice %58 {offsets = [4, 0], sizes = [1, 60], strides = [1, 1]} : vector<8x60xf32> to vector<1x60xf32>
    %c4 = arith.constant 4 : index
    %c0_37 = arith.constant 0 : index
    %c0_38 = arith.constant 0 : index
    %82 = vector.load %arg4[%c4, %c0_37, %c0_38] : memref<8x60x240xf32, #tpu.memory_space<vmem>>, vector<1x60x240xf32>
    %83 = vector.shape_cast %82 : vector<1x60x240xf32> to vector<60x240xf32>
    %cst_39 = arith.constant dense<0.000000e+00> : vector<1x240xf32>
    %84 = tpu.matmul %81, %83, %cst_39 {dimension_numbers = #tpu.dot_dimension_numbers<[1], [0], [0], [1], [0, 0, 1, 1], [], []>} : vector<1x60xf32>, vector<60x240xf32>, vector<1x240xf32> -> vector<1x240xf32>
    %85 = arith.addf %80, %84 : vector<1x240xf32>
    %86 = vector.extract_strided_slice %58 {offsets = [5, 0], sizes = [1, 60], strides = [1, 1]} : vector<8x60xf32> to vector<1x60xf32>
    %c5 = arith.constant 5 : index
    %c0_40 = arith.constant 0 : index
    %c0_41 = arith.constant 0 : index
    %87 = vector.load %arg4[%c5, %c0_40, %c0_41] : memref<8x60x240xf32, #tpu.memory_space<vmem>>, vector<1x60x240xf32>
    %88 = vector.shape_cast %87 : vector<1x60x240xf32> to vector<60x240xf32>
    %cst_42 = arith.constant dense<0.000000e+00> : vector<1x240xf32>
    %89 = tpu.matmul %86, %88, %cst_42 {dimension_numbers = #tpu.dot_dimension_numbers<[1], [0], [0], [1], [0, 0, 1, 1], [], []>} : vector<1x60xf32>, vector<60x240xf32>, vector<1x240xf32> -> vector<1x240xf32>
    %90 = arith.addf %85, %89 : vector<1x240xf32>
    %91 = vector.extract_strided_slice %58 {offsets = [6, 0], sizes = [1, 60], strides = [1, 1]} : vector<8x60xf32> to vector<1x60xf32>
    %c6 = arith.constant 6 : index
    %c0_43 = arith.constant 0 : index
    %c0_44 = arith.constant 0 : index
    %92 = vector.load %arg4[%c6, %c0_43, %c0_44] : memref<8x60x240xf32, #tpu.memory_space<vmem>>, vector<1x60x240xf32>
    %93 = vector.shape_cast %92 : vector<1x60x240xf32> to vector<60x240xf32>
    %cst_45 = arith.constant dense<0.000000e+00> : vector<1x240xf32>
    %94 = tpu.matmul %91, %93, %cst_45 {dimension_numbers = #tpu.dot_dimension_numbers<[1], [0], [0], [1], [0, 0, 1, 1], [], []>} : vector<1x60xf32>, vector<60x240xf32>, vector<1x240xf32> -> vector<1x240xf32>
    %95 = arith.addf %90, %94 : vector<1x240xf32>
    %96 = vector.extract_strided_slice %58 {offsets = [7, 0], sizes = [1, 60], strides = [1, 1]} : vector<8x60xf32> to vector<1x60xf32>
    %c7 = arith.constant 7 : index
    %c0_46 = arith.constant 0 : index
    %c0_47 = arith.constant 0 : index
    %97 = vector.load %arg4[%c7, %c0_46, %c0_47] : memref<8x60x240xf32, #tpu.memory_space<vmem>>, vector<1x60x240xf32>
    %98 = vector.shape_cast %97 : vector<1x60x240xf32> to vector<60x240xf32>
    %cst_48 = arith.constant dense<0.000000e+00> : vector<1x240xf32>
    %99 = tpu.matmul %96, %98, %cst_48 {dimension_numbers = #tpu.dot_dimension_numbers<[1], [0], [0], [1], [0, 0, 1, 1], [], []>} : vector<1x60xf32>, vector<60x240xf32>, vector<1x240xf32> -> vector<1x240xf32>
    %100 = arith.addf %95, %99 : vector<1x240xf32>
    %101 = tpu.iota {dimensions = array<i32: 1>} : vector<8x240xi32>
    %102 = tpu.iota {dimensions = array<i32: 0>} : vector<8x240xi32>
    %c30_i32 = arith.constant 30 : i32
    %103 = vector.broadcast %c30_i32 : i32 to vector<8x240xi32>
    %104 = arith.muli %103, %102 : vector<8x240xi32>
    %105 = arith.subi %101, %104 : vector<8x240xi32>
    %c0_i32 = arith.constant 0 : i32
    %106 = vector.broadcast %c0_i32 : i32 to vector<8x240xi32>
    %107 = arith.cmpi sge, %105, %106 : vector<8x240xi32>
    %c30_i32_49 = arith.constant 30 : i32
    %108 = vector.broadcast %c30_i32_49 : i32 to vector<8x240xi32>
    %109 = arith.cmpi slt, %105, %108 : vector<8x240xi32>
    %110 = arith.andi %107, %109 : vector<8x240xi1>
    %cst_50 = arith.constant 0.000000e+00 : f32
    %111 = vector.shape_cast %100 : vector<1x240xf32> to vector<1x240xf32>
    %112 = vector.broadcast %111 : vector<1x240xf32> to vector<8x240xf32>
    %113 = vector.broadcast %cst_50 : f32 to vector<8x240xf32>
    %114 = arith.select %110, %112, %113 : vector<8x240xi1>, vector<8x240xf32>
    %115 = vector.extract_strided_slice %59 {offsets = [1, 0], sizes = [1, 240], strides = [1, 1]} : vector<8x240xf32> to vector<1x240xf32>
    %116 = vector.broadcast %115 : vector<1x240xf32> to vector<8x240xf32>
    %117 = arith.mulf %114, %116 : vector<8x240xf32>
    %cst_51 = arith.constant dense<0.000000e+00> : vector<8xf32>
    %118 = vector.multi_reduction <add>, %117, %cst_51 [1] : vector<8x240xf32> to vector<8xf32>
    %119 = vector.shape_cast %118 : vector<8xf32> to vector<8x1xf32>
    %c4_52 = arith.constant 4 : index
    %120 = memref.load %arg7[%c4_52] : memref<16xf32, #tpu.memory_space<smem>>
    %121 = vector.broadcast %120 : f32 to vector<8x1xf32>
    %122 = arith.addf %119, %121 : vector<8x1xf32>
    %cst_53 = arith.constant 0.000000e+00 : f32
    %123 = vector.broadcast %cst_53 : f32 to vector<8x1xf32>
    %124 = arith.maximumf %122, %123 : vector<8x1xf32>
    %125 = vector.extract_strided_slice %59 {offsets = [3, 0], sizes = [1, 240], strides = [1, 1]} : vector<8x240xf32> to vector<1x240xf32>
    %126 = vector.extract_strided_slice %59 {offsets = [2, 0], sizes = [1, 240], strides = [1, 1]} : vector<8x240xf32> to vector<1x240xf32>
    %127 = vector.broadcast %124 : vector<8x1xf32> to vector<8x240xf32>
    %128 = vector.broadcast %126 : vector<1x240xf32> to vector<8x240xf32>
    %129 = arith.mulf %127, %128 : vector<8x240xf32>
    %130 = vector.broadcast %125 : vector<1x240xf32> to vector<8x240xf32>
    %131 = arith.addf %130, %129 : vector<8x240xf32>
    %cst_54 = arith.constant 3.000000e+00 : f32
    %132 = vector.broadcast %cst_54 : f32 to vector<8x240xf32>
    %133 = arith.mulf %132, %131 : vector<8x240xf32>
    %134 = arith.negf %133 : vector<8x240xf32>
    %135 = math.exp %134 : vector<8x240xf32>
    %cst_55 = arith.constant 1.000000e+00 : f32
    %136 = vector.broadcast %cst_55 : f32 to vector<8x240xf32>
    %137 = arith.addf %136, %135 : vector<8x240xf32>
    %138 = arith.divf %136, %137 : vector<8x240xf32>
    %139 = arith.mulf %114, %138 : vector<8x240xf32>
    %cst_56 = arith.constant 0xFF800000 : f32
    %140 = vector.broadcast %cst_56 : f32 to vector<8x240xf32>
    %141 = arith.select %110, %139, %140 : vector<8x240xi1>, vector<8x240xf32>
    %cst_57 = arith.constant dense<0xFF800000> : vector<8xf32>
    %142 = vector.multi_reduction <maximumf>, %141, %cst_57 [1] : vector<8x240xf32> to vector<8xf32>
    %143 = vector.shape_cast %142 : vector<8xf32> to vector<8x1xf32>
    %cst_58 = arith.constant dense<0.000000e+00> : vector<8xf32>
    %144 = vector.multi_reduction <add>, %139, %cst_58 [1] : vector<8x240xf32> to vector<8xf32>
    %145 = vector.shape_cast %144 : vector<8xf32> to vector<8x1xf32>
    %cst_59 = arith.constant 0.0333333351 : f32
    %146 = vector.broadcast %cst_59 : f32 to vector<8x1xf32>
    %147 = arith.mulf %145, %146 : vector<8x1xf32>
    %c5_60 = arith.constant 5 : index
    %148 = memref.load %arg7[%c5_60] : memref<16xf32, #tpu.memory_space<smem>>
    %149 = vector.broadcast %148 : f32 to vector<8x1xf32>
    %150 = arith.mulf %143, %149 : vector<8x1xf32>
    %c6_61 = arith.constant 6 : index
    %151 = memref.load %arg7[%c6_61] : memref<16xf32, #tpu.memory_space<smem>>
    %152 = vector.broadcast %151 : f32 to vector<8x1xf32>
    %153 = arith.mulf %147, %152 : vector<8x1xf32>
    %154 = arith.addf %150, %153 : vector<8x1xf32>
    %c7_62 = arith.constant 7 : index
    %155 = memref.load %arg7[%c7_62] : memref<16xf32, #tpu.memory_space<smem>>
    %156 = vector.broadcast %155 : f32 to vector<8x1xf32>
    %157 = arith.mulf %154, %156 : vector<8x1xf32>
    %c8 = arith.constant 8 : index
    %158 = memref.load %arg7[%c8] : memref<16xf32, #tpu.memory_space<smem>>
    %159 = vector.broadcast %158 : f32 to vector<8x1xf32>
    %160 = arith.addf %157, %159 : vector<8x1xf32>
    %161 = arith.negf %160 : vector<8x1xf32>
    %162 = math.exp %161 : vector<8x1xf32>
    %cst_63 = arith.constant 1.000000e+00 : f32
    %163 = vector.broadcast %cst_63 : f32 to vector<8x1xf32>
    %164 = arith.addf %163, %162 : vector<8x1xf32>
    %165 = arith.divf %163, %164 : vector<8x1xf32>
    %166 = vector.broadcast %165 : vector<8x1xf32> to vector<8x240xf32>
    %167 = arith.mulf %139, %166 : vector<8x240xf32>
    %cst_64 = arith.constant 0.000000e+00 : f32
    %168 = vector.broadcast %cst_64 : f32 to vector<8x240xf32>
    %169 = arith.cmpf oge, %167, %168 : vector<8x240xf32>
    %cst_65 = arith.constant 0.00999999977 : f32
    %170 = vector.broadcast %cst_65 : f32 to vector<8x240xf32>
    %171 = arith.mulf %170, %167 : vector<8x240xf32>
    %172 = arith.select %169, %167, %171 : vector<8x240xi1>, vector<8x240xf32>
    %c0_66 = arith.constant 0 : index
    %c0_67 = arith.constant 0 : index
    %173 = vector.load %arg6[%c0_66, %c0_67] : memref<240x30xf32, #tpu.memory_space<vmem>>, vector<240x30xf32>
    %cst_68 = arith.constant dense<0.000000e+00> : vector<8x30xf32>
    %174 = tpu.matmul %172, %173, %cst_68 {dimension_numbers = #tpu.dot_dimension_numbers<[1], [0], [0], [1], [0, 0, 1, 1], [], []>} : vector<8x240xf32>, vector<240x30xf32>, vector<8x30xf32> -> vector<8x30xf32>
    %c0_69 = arith.constant 0 : index
    %c0_70 = arith.constant 0 : index
    %175 = vector.load %arg8[%c0_69, %c0_70] : memref<8x30xf32, #tpu.memory_space<vmem>>, vector<8x30xf32>
    tpu.vector_store %arg8[%c0_69, %c0_70], %174 {strides = array<i32>} : memref<8x30xf32, #tpu.memory_space<vmem>>, vector<8x30xf32>,
    return
  }
}

</mosaic_0001>

<llo_original>
// kernel: ginn3_forward.1
$region0: #{ginn3_forward.1}
  #allocation0 [shape = 'u32[]', space=smem, size = 0x4, offset = 0x4, fixed_abs, tag = 'smem constant byte address 0x4 - core index']
  #allocation1 [shape = 'u32[144,128]{1,0:T(1,128)}', space=vmem, size = 0x12000, scoped, tag = 'internal scratch']
  %s0 = inlined_call_operand.vmem [shape: f32[8,120], index: 0, kind: input, shape index: {}]
  %s1 = inlined_call_operand.vmem [shape: f32[120,60], index: 1, kind: input, shape index: {}]
  %s2 = inlined_call_operand.vmem [shape: f32[16,60], index: 2, kind: input, shape index: {}]
  %s3 = inlined_call_operand.vmem [shape: f32[64,8], index: 3, kind: input, shape index: {}]
  %s4 = inlined_call_operand.vmem [shape: f32[8,60,240], index: 4, kind: input, shape index: {}]
  %s5 = inlined_call_operand.vmem [shape: f32[8,240], index: 5, kind: input, shape index: {}]
  %s6 = inlined_call_operand.vmem [shape: f32[240,30], index: 6, kind: input, shape index: {}]
  %s7 = inlined_call_operand.vmem [shape: f32[16], index: 7, kind: input, shape index: {}]
  %s8 = inlined_call_operand.hbm [shape: f32[8,30], index: 8, kind: output, shape index: {}]
  %s9 = sld [smem:[#allocation0]]
  $region46: #{ginn3_forward.1} parent=0
    _
  %s11 = ssub.s32 1, %s9
  %s12 = scalar_select 0, %s11, %s9
  $region1: #{ginn3_forward.1} parent=0
    #allocation2 [shape = 'u8[512]{0}', space=smem, size = 0x200, scoped, tag = 'input window, operand 7, single buffered']
    #allocation3 [shape = 's32[1]{0}', space=sflag, size = 0x4, scoped, tag = 'scoped memory for ginn3_forward.1']
    #allocation4 [shape = 's32[1]{0}', space=sflag, size = 0x4, scoped, tag = 'scoped memory for ginn3_forward.1']
    #allocation5 [shape = 'u8[4096]{0}', space=vmem, size = 0x1000, scoped, tag = 'output window, operand 0, single buffered']
    %13 = vsyncpa [#allocation4], 0
    %14 = vsyncpa [#allocation3], 0
    // Predicated region
    $region2: #{ginn3_forward.1} parent=1 // pred_check
      _
    $region3: #{ginn3_forward.1} parent=1 // pred_check_branch
      %16 = sbr.rel (0) target = $region5
    $region4: #{ginn3_forward.1} parent=1 // pred_region
      _
    $region5: #{ginn3_forward.1} parent=1 // pred_fallthru
      _
    // Predicated region
    $region6: #{ginn3_forward.1} parent=1 // pred_check
      _
    $region7: #{ginn3_forward.1} parent=1 // pred_check_branch
      %18 = sbr.rel (0) target = $region9
    $region8: #{ginn3_forward.1} parent=1 // pred_region
      _
    $region9: #{ginn3_forward.1} parent=1 // pred_fallthru
      _
    // Predicated region
    $region10: #{ginn3_forward.1} parent=1 // pred_check
      _
    $region11: #{ginn3_forward.1} parent=1 // pred_check_branch
      %20 = sbr.rel (0) target = $region13
    $region12: #{ginn3_forward.1} parent=1 // pred_region
      _
    $region13: #{ginn3_forward.1} parent=1 // pred_fallthru
      _
    // Predicated region
    $region14: #{ginn3_forward.1} parent=1 // pred_check
      _
    $region15: #{ginn3_forward.1} parent=1 // pred_check_branch
      %22 = sbr.rel (0) target = $region17
    $region16: #{ginn3_forward.1} parent=1 // pred_region
      _
    $region17: #{ginn3_forward.1} parent=1 // pred_fallthru
      _
    // Predicated region
    $region18: #{ginn3_forward.1} parent=1 // pred_check
      _
    $region19: #{ginn3_forward.1} parent=1 // pred_check_branch
      %24 = sbr.rel (0) target = $region21
    $region20: #{ginn3_forward.1} parent=1 // pred_region
      _
    $region21: #{ginn3_forward.1} parent=1 // pred_fallthru
      _
    // Predicated region
    $region22: #{ginn3_forward.1} parent=1 // pred_check
      _
    $region23: #{ginn3_forward.1} parent=1 // pred_check_branch
      %26 = sbr.rel (0) target = $region25
    $region24: #{ginn3_forward.1} parent=1 // pred_region
      _
    $region25: #{ginn3_forward.1} parent=1 // pred_fallthru
      _
    // Predicated region
    $region26: #{ginn3_forward.1} parent=1 // pred_check
      _
    $region27: #{ginn3_forward.1} parent=1 // pred_check_branch
      %28 = sbr.rel (0) target = $region29
    $region28: #{ginn3_forward.1} parent=1 // pred_region
      _
    $region29: #{ginn3_forward.1} parent=1 // pred_fallthru
      _
    // Predicated region
    $region30: #{ginn3_forward.1} parent=1 // pred_check
      _
    $region31: #{ginn3_forward.1} parent=1 // pred_check_branch
      %30 = sbr.rel (0) target = $region33
    $region32: #{ginn3_forward.1} parent=1 // pred_region
      %s32 = ssub.s32 16, 16
      %33 = vsyncadd [#allocation4], %s32
      %s35 = sshll.u32 %s7, 4
      %s36 = int_to_ptr.vmem [resolvable:$true] %s35
      %38 = dma.vmem_to_smem %s36, 16, [#allocation2], [#allocation4]
    $region33: #{ginn3_forward.1} parent=1 // pred_fallthru
      _
    // Predicated region
    $region34: #{ginn3_forward.1} parent=1 // pred_check
      _
    $region35: #{ginn3_forward.1} parent=1 // pred_check_branch
      %40 = sbr.rel (0) target = $region37
    $region36: #{ginn3_forward.1} parent=1 // pred_region
      %41 = dma.done [#allocation4], 16
    $region37: #{ginn3_forward.1} parent=1 // pred_fallthru
      _
    %42 = sfence
    %v43 = vld [vmem:[%s0] sm:$0xff]
    %v44 = vld [vmem:[%s2] sm:$0xff]
    %v45 = vld [vmem:[%s2 + $0x8] sm:$0xff]
    %v46 = vld [vmem:[%s3] sm:$0xff]
    %v47 = vld [vmem:[%s3 + $0x8] sm:$0xff]
    %v48 = vld [vmem:[%s3 + $0x10] sm:$0xff]
    %v49 = vld [vmem:[%s3 + $0x18] sm:$0xff]
    %v50 = vld [vmem:[%s3 + $0x20] sm:$0xff]
    %v51 = vld [vmem:[%s3 + $0x28] sm:$0xff]
    %v52 = vld [vmem:[%s3 + $0x30] sm:$0xff]
    %v53 = vld [vmem:[%s3 + $0x38] sm:$0xff]
    %v54 = vld [vmem:[%s1] sm:$0xff]
    %v55 = vld [vmem:[%s1 + $0x8] sm:$0xff]
    %v56 = vld [vmem:[%s1 + $0x10] sm:$0xff]
    %v57 = vld [vmem:[%s1 + $0x18] sm:$0xff]
    %v58 = vld [vmem:[%s1 + $0x20] sm:$0xff]
    %v59 = vld [vmem:[%s1 + $0x28] sm:$0xff]
    %v60 = vld [vmem:[%s1 + $0x30] sm:$0xff]
    %v61 = vld [vmem:[%s1 + $0x38] sm:$0xff]
    %v62 = vld [vmem:[%s1 + $0x40] sm:$0xff]
    %v63 = vld [vmem:[%s1 + $0x48] sm:$0xff]
    %v64 = vld [vmem:[%s1 + $0x50] sm:$0xff]
    %v65 = vld [vmem:[%s1 + $0x58] sm:$0xff]
    %v66 = vld [vmem:[%s1 + $0x60] sm:$0xff]
    %v67 = vld [vmem:[%s1 + $0x68] sm:$0xff]
    %v68 = vld [vmem:[%s1 + $0x70] sm:$0xff]
    %v69 = vlaneseq
    %v70 = vshrl.u32 %v69, 7
    %v71 = vsub.s32 0, %v70
    %v72 = vrot.slane %v44, %v71
    %vm73 = vcmask 982016
    %v75 = vsel %vm73, %v43, 0
    %77 = vmatprep.subr.mxu0 0.0
    %78 = vmatpush1.msra.mxu0 %v54
    %79 = vmatprep.subr.mxu0 0.0
    %80 = vmatpush1.msra.mxu0 %v55
    %81 = vmatprep.subr.mxu0 0.0
    %82 = vmatpush1.msra.mxu0 %v56
    %83 = vmatprep.subr.mxu0 0.0
    %84 = vmatpush1.msra.mxu0 %v57
    %85 = vmatprep.subr.mxu0 0.0
    %86 = vmatpush1.msra.mxu0 %v58
    %87 = vmatprep.subr.mxu0 0.0
    %88 = vmatpush1.msra.mxu0 %v59
    %89 = vmatprep.subr.mxu0 0.0
    %90 = vmatpush1.msra.mxu0 %v60
    %91 = vmatprep.subr.mxu0 0.0
    %92 = vmatpush1.msra.mxu0 %v61
    %93 = vmatprep.subr.mxu0 0.0
    %94 = vmatpush1.msra.mxu0 %v62
    %95 = vmatprep.subr.mxu0 0.0
    %96 = vmatpush1.msra.mxu0 %v63
    %97 = vmatprep.subr.mxu0 0.0
    %98 = vmatpush1.msra.mxu0 %v64
    %99 = vmatprep.subr.mxu0 0.0
    %100 = vmatpush1.msra.mxu0 %v65
    %101 = vmatprep.subr.mxu0 0.0
    %102 = vmatpush1.msra.mxu0 %v66
    %103 = vmatprep.subr.mxu0 0.0
    %104 = vmatpush1.msra.mxu0 %v67
    %105 = vmatprep.subr.mxu0 0.0
    %106 = vmatpush1.msra.mxu0 %v68
    %107 = vmatprep.subr.mxu0 0.0
    %108 = vmatpush1.msra.mxu0 0.0
    %109 = vmatprep.subr.mxu0 0.0
    %110 = vmatpush1.msra.mxu0 0.0
    %111 = vmatprep.subr.mxu0 0.0
    %112 = vmatpush1.msra.mxu0 0.0
    %113 = vmatprep.subr.mxu0 0.0
    %114 = vmatpush1.msra.mxu0 0.0
    %115 = vmatprep.subr.mxu0 0.0
    %116 = vmatpush1.msra.mxu0 0.0
    %117 = vmatprep.subr.mxu0 0.0
    %118 = vmatpush1.msra.mxu0 0.0
    %119 = vmatprep.subr.mxu0 0.0
    %120 = vmatpush1.msra.mxu0 0.0
    %121 = vmatprep.subr.mxu0 0.0
    %122 = vmatpush1.msra.mxu0 0.0
    %123 = vmatprep.subr.mxu0 0.0
    %124 = vmatpush1.msra.mxu0 0.0
    %125 = vmatprep.subr.mxu0 0.0
    %126 = vmatpush1.msra.mxu0 0.0
    %127 = vmatprep.subr.mxu0 0.0
    %128 = vmatpush1.msra.mxu0 0.0
    %129 = vmatprep.subr.mxu0 0.0
    %130 = vmatpush1.msra.mxu0 0.0
    %131 = vmatprep.subr.mxu0 0.0
    %132 = vmatpush1.msra.mxu0 0.0
    %133 = vmatprep.subr.mxu0 0.0
    %134 = vmatpush1.msra.mxu0 0.0
    %135 = vmatprep.subr.mxu0 0.0
    %136 = vmatpush1.msra.mxu0 0.0
    %137 = vmatprep.subr.mxu0 0.0
    %138 = vmatpush1.msra.mxu0 0.0
    %139 = vmatprep.subr.mxu0 0.0
    %140 = vmatpush1.msra.mxu0 0.0
    %141 = vmatprep.mubr.f32.mxu0 0.0
    %142 = vmatmul.mubr.f32.gmra.mrb[0].mxu0 %v75
    %v143 = vpop.f32.mrb[0].mxu0
    %v144 = vadd.f32 %v72, %v143
    %v145 = vpop.f32.mrb[0].mxu0
    %146 = vdwg.mxu0
    %v147 = vlaneseq
    %v148 = vshrl.u32 %v147, 7
    %v149 = vsub.s32 4, %v148
    %v150 = vrot.slane %v53, %v149
    %vm151 = vcmask 490496
    %v153 = vsel %vm151, %v144, 0
    %vm155 = vcmask 1043456
    %v157 = vsel %vm155, %v53, 0
    %159 = vmatprep.subr.mxu0 0.0
    %160 = vmatpush1.msra.mxu0 %v46
    %161 = vmatprep.subr.mxu0 0.0
    %162 = vmatpush1.msra.mxu0 %v47
    %163 = vmatprep.subr.mxu0 0.0
    %164 = vmatpush1.msra.mxu0 %v48
    %165 = vmatprep.subr.mxu0 0.0
    %166 = vmatpush1.msra.mxu0 %v49
    %167 = vmatprep.subr.mxu0 0.0
    %168 = vmatpush1.msra.mxu0 %v50
    %169 = vmatprep.subr.mxu0 0.0
    %170 = vmatpush1.msra.mxu0 %v51
    %171 = vmatprep.subr.mxu0 0.0
    %172 = vmatpush1.msra.mxu0 %v52
    %173 = vmatprep.subr.mxu0 0.0
    %174 = vmatpush1.msra.mxu0 %v157
    %175 = vmatprep.subr.mxu0 0.0
    %176 = vmatpush1.msra.mxu0 0.0
    %177 = vmatprep.subr.mxu0 0.0
    %178 = vmatpush1.msra.mxu0 0.0
    %179 = vmatprep.subr.mxu0 0.0
    %180 = vmatpush1.msra.mxu0 0.0
    %181 = vmatprep.subr.mxu0 0.0
    %182 = vmatpush1.msra.mxu0 0.0
    %183 = vmatprep.subr.mxu0 0.0
    %184 = vmatpush1.msra.mxu0 0.0
    %185 = vmatprep.subr.mxu0 0.0
    %186 = vmatpush1.msra.mxu0 0.0
    %187 = vmatprep.subr.mxu0 0.0
    %188 = vmatpush1.msra.mxu0 0.0
    %189 = vmatprep.subr.mxu0 0.0
    %190 = vmatpush1.msra.mxu0 0.0
    %191 = vmatprep.subr.mxu0 0.0
    %192 = vmatpush1.msra.mxu0 0.0
    %193 = vmatprep.subr.mxu0 0.0
    %194 = vmatpush1.msra.mxu0 0.0
    %195 = vmatprep.subr.mxu0 0.0
    %196 = vmatpush1.msra.mxu0 0.0
    %197 = vmatprep.subr.mxu0 0.0
    %198 = vmatpush1.msra.mxu0 0.0
    %199 = vmatprep.subr.mxu0 0.0
    %200 = vmatpush1.msra.mxu0 0.0
    %201 = vmatprep.subr.mxu0 0.0
    %202 = vmatpush1.msra.mxu0 0.0
    %203 = vmatprep.subr.mxu0 0.0
    %204 = vmatpush1.msra.mxu0 0.0
    %205 = vmatprep.subr.mxu0 0.0
    %206 = vmatpush1.msra.mxu0 0.0
    %207 = vmatprep.subr.mxu0 0.0
    %208 = vmatpush1.msra.mxu0 0.0
    %209 = vmatprep.subr.mxu0 0.0
    %210 = vmatpush1.msra.mxu0 0.0
    %211 = vmatprep.subr.mxu0 0.0
    %212 = vmatpush1.msra.mxu0 0.0
    %213 = vmatprep.subr.mxu0 0.0
    %214 = vmatpush1.msra.mxu0 0.0
    %215 = vmatprep.subr.mxu0 0.0
    %216 = vmatpush1.msra.mxu0 0.0
    %217 = vmatprep.subr.mxu0 0.0
    %218 = vmatpush1.msra.mxu0 0.0
    %219 = vmatprep.subr.mxu0 0.0
    %220 = vmatpush1.msra.mxu0 0.0
    %221 = vmatprep.subr.mxu0 0.0
    %222 = vmatpush1.msra.mxu0 0.0
    %223 = vmatprep.mubr.f32.mxu0 0.0
    %224 = vmatmul.mubr.f32.gmra.mrb[0].mxu0 %v153
    %v225 = vpop.f32.mrb[0].mxu0
    %v226 = vadd.f32 %v150, %v225
    %v227 = vpop.f32.mrb[0].mxu0
    %228 = vdwg.mxu0
    %v229 = vmax.f32 %v226, 0.0
    %vm232 = vcmask 1045504
    %v233 = vrot.slane %v44, 2
    %v234 = vrot.slane %v45, 2
    %v235 = vsel %vm232, %v233, %v234
    %vm237 = vcmask 64512
    %v239 = vsel %vm237, %v229, 0
    %241 = vmatprep.subr.mxu0 0.0
    %242 = vmatpush1.msra.mxu0 %v235
    %243 = vmatprep.subr.mxu0 0.0
    %244 = vmatpush1.msra.mxu0 0.0
    %245 = vmatprep.subr.mxu0 0.0
    %246 = vmatpush1.msra.mxu0 0.0
    %247 = vmatprep.subr.mxu0 0.0
    %248 = vmatpush1.msra.mxu0 0.0
    %249 = vmatprep.subr.mxu0 0.0
    %250 = vmatpush1.msra.mxu0 0.0
    %251 = vmatprep.subr.mxu0 0.0
    %252 = vmatpush1.msra.mxu0 0.0
    %253 = vmatprep.subr.mxu0 0.0
    %254 = vmatpush1.msra.mxu0 0.0
    %255 = vmatprep.subr.mxu0 0.0
    %256 = vmatpush1.msra.mxu0 0.0
    %257 = vmatprep.subr.mxu0 0.0
    %258 = vmatpush1.msra.mxu0 0.0
    %259 = vmatprep.subr.mxu0 0.0
    %260 = vmatpush1.msra.mxu0 0.0
    %261 = vmatprep.subr.mxu0 0.0
    %262 = vmatpush1.msra.mxu0 0.0
    %263 = vmatprep.subr.mxu0 0.0
    %264 = vmatpush1.msra.mxu0 0.0
    %265 = vmatprep.subr.mxu0 0.0
    %266 = vmatpush1.msra.mxu0 0.0
    %267 = vmatprep.subr.mxu0 0.0
    %268 = vmatpush1.msra.mxu0 0.0
    %269 = vmatprep.subr.mxu0 0.0
    %270 = vmatpush1.msra.mxu0 0.0
    %271 = vmatprep.subr.mxu0 0.0
    %272 = vmatpush1.msra.mxu0 0.0
    %273 = vmatprep.subr.mxu0 0.0
    %274 = vmatpush1.msra.mxu0 0.0
    %275 = vmatprep.subr.mxu0 0.0
    %276 = vmatpush1.msra.mxu0 0.0
    %277 = vmatprep.subr.mxu0 0.0
    %278 = vmatpush1.msra.mxu0 0.0
    %279 = vmatprep.subr.mxu0 0.0
    %280 = vmatpush1.msra.mxu0 0.0
    %281 = vmatprep.subr.mxu0 0.0
    %282 = vmatpush1.msra.mxu0 0.0
    %283 = vmatprep.subr.mxu0 0.0
    %284 = vmatpush1.msra.mxu0 0.0
    %285 = vmatprep.subr.mxu0 0.0
    %286 = vmatpush1.msra.mxu0 0.0
    %287 = vmatprep.subr.mxu0 0.0
    %288 = vmatpush1.msra.mxu0 0.0
    %289 = vmatprep.subr.mxu0 0.0
    %290 = vmatpush1.msra.mxu0 0.0
    %291 = vmatprep.subr.mxu0 0.0
    %292 = vmatpush1.msra.mxu0 0.0
    %293 = vmatprep.subr.mxu0 0.0
    %294 = vmatpush1.msra.mxu0 0.0
    %295 = vmatprep.subr.mxu0 0.0
    %296 = vmatpush1.msra.mxu0 0.0
    %297 = vmatprep.subr.mxu0 0.0
    %298 = vmatpush1.msra.mxu0 0.0
    %299 = vmatprep.subr.mxu0 0.0
    %300 = vmatpush1.msra.mxu0 0.0
    %301 = vmatprep.subr.mxu0 0.0
    %302 = vmatpush1.msra.mxu0 0.0
    %303 = vmatprep.subr.mxu0 0.0
    %304 = vmatpush1.msra.mxu0 0.0
    %305 = vmatprep.mubr.f32.mxu0 0.0
    %306 = vmatmul.mubr.f32.gmra.mrb[0].mxu0 %v239
    %v307 = vpop.f32.mrb[0].mxu0
    %v308 = vadd.f32 0.0, %v307
    %v309 = vpop.f32.mrb[0].mxu0
    %310 = vdwg.mxu0
    %v311 = vlaneseq
    %v312 = vshrl.u32 %v311, 7
    %v313 = vsub.s32 1, %v312
    %v314 = vrot.slane %v44, %v313
    %v315 = vadd.f32 %v314, %v308
    %v316 = vmul.f32 %v315, 3.0
    %v317 = vxor.u32 %v316, 2147483648
    %v318 = vmul.f32 %v317, 1.442695
    %v319 = vpow.pop %v318
    %v320 = vadd.f32 %v319, 1.0
    %v321 = vrcp.pop %v320
    %v322 = vmul.f32 1.0, %v321
    %v323 = vmul.f32 %v144, %v322
    %v324 = vsel %vm151, %v323, -inf
    %325 = vmax.xlane.f32.xlu0 %v324
    %v326 = vpop.xlane.xlu0 %325
    %v327 = vsel %vm151, %v323, 0.0
    %328 = vadd.xlane.f32.xlu0 %v327
    %v329 = vpop.xlane.xlu0 %328
    %v330 = vmul.f32 %v329, 0.016666668
    %s331 = sld [smem:[#allocation2]]
    %v332 = vstv %s331
    %v333 = vmul.f32 %v326, %v332
    %s334 = sld [smem:[#allocation2 + $0x1]]
    %v335 = vstv %s334
    %v336 = vmul.f32 %v330, %v335
    %v337 = vadd.f32 %v333, %v336
    %s338 = sld [smem:[#allocation2 + $0x2]]
    %v339 = vstv %s338
    %v340 = vmul.f32 %v337, %v339
    %s341 = sld [smem:[#allocation2 + $0x3]]
    %v342 = vstv %s341
    %v343 = vadd.f32 %v340, %v342
    %v344 = vxor.u32 %v343, 2147483648
    %v345 = vmul.f32 %v344, 1.442695
    %v346 = vpow.pop %v345
    %v347 = vadd.f32 %v346, 1.0
    %v348 = vrcp.pop %v347
    %v349 = vmul.f32 1.0, %v348
    %v350 = vmul.f32 %v323, %v349
    %vm351 = vcmp.ge.f32.partialorder %v350, 0.0
    %v352 = vmul.f32 %v350, 0.01
    %v353 = vsel %vm351, %v350, %v352
    %v354 = vld [vmem:[%s5] sm:$0xff]
    %v355 = vld [vmem:[%s5 + $0x8] sm:$0xff]
    %v356 = vld [vmem:[%s4] sm:$0xff]
    %v357 = vld [vmem:[%s4 + $0x8] sm:$0xff]
    %v358 = vld [vmem:[%s4 + $0x10] sm:$0xff]
    %v359 = vld [vmem:[%s4 + $0x18] sm:$0xff]
    %v360 = vld [vmem:[%s4 + $0x20] sm:$0xff]
    %v361 = vld [vmem:[%s4 + $0x28] sm:$0xff]
    %v362 = vld [vmem:[%s4 + $0x30] sm:$0xff]
    %v363 = vld [vmem:[%s4 + $0x38] sm:$0xff]
    %v364 = vld [vmem:[%s4 + $0x40] sm:$0xff]
    %v365 = vld [vmem:[%s4 + $0x48] sm:$0xff]
    %v366 = vld [vmem:[%s4 + $0x50] sm:$0xff]
    %v367 = vld [vmem:[%s4 + $0x58] sm:$0xff]
    %v368 = vld [vmem:[%s4 + $0x60] sm:$0xff]
    %v369 = vld [vmem:[%s4 + $0x68] sm:$0xff]
    %v370 = vld [vmem:[%s4 + $0x70] sm:$0xf]
    %v371 = vld [vmem:[%s4 + $0x78] sm:$0xf]
    %v373 = vsel %vm151, %v353, 0
    %v376 = vsel %vm155, %v370, 0
    %v379 = vsel %vm155, %v371, 0
    %381 = vmatprep.subr.mxu0 %v357
    %382 = vmatpush1.msra.mxu0 %v356
    %383 = vmatprep.subr.mxu0 %v359
    %384 = vmatpush1.msra.mxu0 %v358
    %385 = vmatprep.subr.mxu0 %v361
    %386 = vmatpush1.msra.mxu0 %v360
    %387 = vmatprep.subr.mxu0 %v363
    %388 = vmatpush1.msra.mxu0 %v362
    %389 = vmatprep.subr.mxu0 %v365
    %390 = vmatpush1.msra.mxu0 %v364
    %391 = vmatprep.subr.mxu0 %v367
    %392 = vmatpush1.msra.mxu0 %v366
    %393 = vmatprep.subr.mxu0 %v369
    %394 = vmatpush1.msra.mxu0 %v368
    %395 = vmatprep.subr.mxu0 %v379
    %396 = vmatpush1.msra.mxu0 %v376
    %397 = vmatprep.subr.mxu0 0.0
    %398 = vmatpush1.msra.mxu0 0.0
    %399 = vmatprep.subr.mxu0 0.0
    %400 = vmatpush1.msra.mxu0 0.0
    %401 = vmatprep.subr.mxu0 0.0
    %402 = vmatpush1.msra.mxu0 0.0
    %403 = vmatprep.subr.mxu0 0.0
    %404 = vmatpush1.msra.mxu0 0.0
    %405 = vmatprep.subr.mxu0 0.0
    %406 = vmatpush1.msra.mxu0 0.0
    %407 = vmatprep.subr.mxu0 0.0
    %408 = vmatpush1.msra.mxu0 0.0
    %409 = vmatprep.subr.mxu0 0.0
    %410 = vmatpush1.msra.mxu0 0.0
    %411 = vmatprep.subr.mxu0 0.0
    %412 = vmatpush1.msra.mxu0 0.0
    %413 = vmatprep.subr.mxu0 0.0
    %414 = vmatpush1.msra.mxu0 0.0
    %415 = vmatprep.subr.mxu0 0.0
    %416 = vmatpush1.msra.mxu0 0.0
    %417 = vmatprep.subr.mxu0 0.0
    %418 = vmatpush1.msra.mxu0 0.0
    %419 = vmatprep.subr.mxu0 0.0
    %420 = vmatpush1.msra.mxu0 0.0
    %421 = vmatprep.subr.mxu0 0.0
    %422 = vmatpush1.msra.mxu0 0.0
    %423 = vmatprep.subr.mxu0 0.0
    %424 = vmatpush1.msra.mxu0 0.0
    %425 = vmatprep.subr.mxu0 0.0
    %426 = vmatpush1.msra.mxu0 0.0
    %427 = vmatprep.subr.mxu0 0.0
    %428 = vmatpush1.msra.mxu0 0.0
    %429 = vmatprep.subr.mxu0 0.0
    %430 = vmatpush1.msra.mxu0 0.0
    %431 = vmatprep.subr.mxu0 0.0
    %432 = vmatpush1.msra.mxu0 0.0
    %433 = vmatprep.subr.mxu0 0.0
    %434 = vmatpush1.msra.mxu0 0.0
    %435 = vmatprep.subr.mxu0 0.0
    %436 = vmatpush1.msra.mxu0 0.0
    %437 = vmatprep.subr.mxu0 0.0
    %438 = vmatpush1.msra.mxu0 0.0
    %439 = vmatprep.subr.mxu0 0.0
    %440 = vmatpush1.msra.mxu0 0.0
    %441 = vmatprep.subr.mxu0 0.0
    %442 = vmatpush1.msra.mxu0 0.0
    %443 = vmatprep.subr.mxu0 0.0
    %444 = vmatpush1.msra.mxu0 0.0
    %445 = vmatprep.mubr.f32.mxu0 0.0
    %446 = vmatmul.mubr.f32.gmra.mrb[0].mxu0 %v373
    %v447 = vpop.f32.mrb[0].mxu0
    %v448 = vadd.f32 0.0, %v447
    %v449 = vpop.f32.mrb[0].mxu0
    %v450 = vadd.f32 0.0, %v449
    %451 = vdwg.mxu0
    %v452 = vadd.f32 %v354, %v448
    %v453 = vadd.f32 %v355, %v450
    %s454 = scalar_lea.vmem %s4, 128
    %v455 = vld [vmem:[%s454] sm:$0xff]
    %v456 = vld [vmem:[%s454 + $0x8] sm:$0xff]
    %v457 = vld [vmem:[%s454 + $0x10] sm:$0xff]
    %v458 = vld [vmem:[%s454 + $0x18] sm:$0xff]
    %v459 = vld [vmem:[%s454 + $0x20] sm:$0xff]
    %v460 = vld [vmem:[%s454 + $0x28] sm:$0xff]
    %v461 = vld [vmem:[%s454 + $0x30] sm:$0xff]
    %v462 = vld [vmem:[%s454 + $0x38] sm:$0xff]
    %v463 = vld [vmem:[%s454 + $0x40] sm:$0xff]
    %v464 = vld [vmem:[%s454 + $0x48] sm:$0xff]
    %v465 = vld [vmem:[%s454 + $0x50] sm:$0xff]
    %v466 = vld [vmem:[%s454 + $0x58] sm:$0xff]
    %v467 = vld [vmem:[%s454 + $0x60] sm:$0xff]
    %v468 = vld [vmem:[%s454 + $0x68] sm:$0xff]
    %v469 = vld [vmem:[%s454 + $0x70] sm:$0xf]
    %v470 = vld [vmem:[%s454 + $0x78] sm:$0xf]
    %v471 = vrot.slane %v353, 1
    %v472 = vsel %vm151, %v471, 0
    %v475 = vsel %vm155, %v469, 0
    %v478 = vsel %vm155, %v470, 0
    %480 = vmatprep.subr.mxu0 %v456
    %481 = vmatpush1.msra.mxu0 %v455
    %482 = vmatprep.subr.mxu0 %v458
    %483 = vmatpush1.msra.mxu0 %v457
    %484 = vmatprep.subr.mxu0 %v460
    %485 = vmatpush1.msra.mxu0 %v459
    %486 = vmatprep.subr.mxu0 %v462
    %487 = vmatpush1.msra.mxu0 %v461
    %488 = vmatprep.subr.mxu0 %v464
    %489 = vmatpush1.msra.mxu0 %v463
    %490 = vmatprep.subr.mxu0 %v466
    %491 = vmatpush1.msra.mxu0 %v465
    %492 = vmatprep.subr.mxu0 %v468
    %493 = vmatpush1.msra.mxu0 %v467
    %494 = vmatprep.subr.mxu0 %v478
    %495 = vmatpush1.msra.mxu0 %v475
    %496 = vmatprep.subr.mxu0 0.0
    %497 = vmatpush1.msra.mxu0 0.0
    %498 = vmatprep.subr.mxu0 0.0
    %499 = vmatpush1.msra.mxu0 0.0
    %500 = vmatprep.subr.mxu0 0.0
    %501 = vmatpush1.msra.mxu0 0.0
    %502 = vmatprep.subr.mxu0 0.0
    %503 = vmatpush1.msra.mxu0 0.0
    %504 = vmatprep.subr.mxu0 0.0
    %505 = vmatpush1.msra.mxu0 0.0
    %506 = vmatprep.subr.mxu0 0.0
    %507 = vmatpush1.msra.mxu0 0.0
    %508 = vmatprep.subr.mxu0 0.0
    %509 = vmatpush1.msra.mxu0 0.0
    %510 = vmatprep.subr.mxu0 0.0
    %511 = vmatpush1.msra.mxu0 0.0
    %512 = vmatprep.subr.mxu0 0.0
    %513 = vmatpush1.msra.mxu0 0.0
    %514 = vmatprep.subr.mxu0 0.0
    %515 = vmatpush1.msra.mxu0 0.0
    %516 = vmatprep.subr.mxu0 0.0
    %517 = vmatpush1.msra.mxu0 0.0
    %518 = vmatprep.subr.mxu0 0.0
    %519 = vmatpush1.msra.mxu0 0.0
    %520 = vmatprep.subr.mxu0 0.0
    %521 = vmatpush1.msra.mxu0 0.0
    %522 = vmatprep.subr.mxu0 0.0
    %523 = vmatpush1.msra.mxu0 0.0
    %524 = vmatprep.subr.mxu0 0.0
    %525 = vmatpush1.msra.mxu0 0.0
    %526 = vmatprep.subr.mxu0 0.0
    %527 = vmatpush1.msra.mxu0 0.0
    %528 = vmatprep.subr.mxu0 0.0
    %529 = vmatpush1.msra.mxu0 0.0
    %530 = vmatprep.subr.mxu0 0.0
    %531 = vmatpush1.msra.mxu0 0.0
    %532 = vmatprep.subr.mxu0 0.0
    %533 = vmatpush1.msra.mxu0 0.0
    %534 = vmatprep.subr.mxu0 0.0
    %535 = vmatpush1.msra.mxu0 0.0
    %536 = vmatprep.subr.mxu0 0.0
    %537 = vmatpush1.msra.mxu0 0.0
    %538 = vmatprep.subr.mxu0 0.0
    %539 = vmatpush1.msra.mxu0 0.0
    %540 = vmatprep.subr.mxu0 0.0
    %541 = vmatpush1.msra.mxu0 0.0
    %542 = vmatprep.subr.mxu0 0.0
    %543 = vmatpush1.msra.mxu0 0.0
    %544 = vmatprep.mubr.f32.mxu0 0.0
    %545 = vmatmul.mubr.f32.gmra.mrb[0].mxu0 %v472
    %v546 = vpop.f32.mrb[0].mxu0
    %v547 = vadd.f32 0.0, %v546
    %v548 = vpop.f32.mrb[0].mxu0
    %v549 = vadd.f32 0.0, %v548
    %550 = vdwg.mxu0
    %v551 = vadd.f32 %v452, %v547
    %v552 = vadd.f32 %v453, %v549
    %s553 = scalar_lea.vmem %s4, 256
    %v554 = vld [vmem:[%s553] sm:$0xff]
    %v555 = vld [vmem:[%s553 + $0x8] sm:$0xff]
    %v556 = vld [vmem:[%s553 + $0x10] sm:$0xff]
    %v557 = vld [vmem:[%s553 + $0x18] sm:$0xff]
    %v558 = vld [vmem:[%s553 + $0x20] sm:$0xff]
    %v559 = vld [vmem:[%s553 + $0x28] sm:$0xff]
    %v560 = vld [vmem:[%s553 + $0x30] sm:$0xff]
    %v561 = vld [vmem:[%s553 + $0x38] sm:$0xff]
    %v562 = vld [vmem:[%s553 + $0x40] sm:$0xff]
    %v563 = vld [vmem:[%s553 + $0x48] sm:$0xff]
    %v564 = vld [vmem:[%s553 + $0x50] sm:$0xff]
    %v565 = vld [vmem:[%s553 + $0x58] sm:$0xff]
    %v566 = vld [vmem:[%s553 + $0x60] sm:$0xff]
    %v567 = vld [vmem:[%s553 + $0x68] sm:$0xff]
    %v568 = vld [vmem:[%s553 + $0x70] sm:$0xf]
    %v569 = vld [vmem:[%s553 + $0x78] sm:$0xf]
    %v570 = vrot.slane %v353, 2
    %v571 = vsel %vm151, %v570, 0
    %v574 = vsel %vm155, %v568, 0
    %v577 = vsel %vm155, %v569, 0
    %579 = vmatprep.subr.mxu0 %v555
    %580 = vmatpush1.msra.mxu0 %v554
    %581 = vmatprep.subr.mxu0 %v557
    %582 = vmatpush1.msra.mxu0 %v556
    %583 = vmatprep.subr.mxu0 %v559
    %584 = vmatpush1.msra.mxu0 %v558
    %585 = vmatprep.subr.mxu0 %v561
    %586 = vmatpush1.msra.mxu0 %v560
    %587 = vmatprep.subr.mxu0 %v563
    %588 = vmatpush1.msra.mxu0 %v562
    %589 = vmatprep.subr.mxu0 %v565
    %590 = vmatpush1.msra.mxu0 %v564
    %591 = vmatprep.subr.mxu0 %v567
    %592 = vmatpush1.msra.mxu0 %v566
    %593 = vmatprep.subr.mxu0 %v577
    %594 = vmatpush1.msra.mxu0 %v574
    %595 = vmatprep.subr.mxu0 0.0
    %596 = vmatpush1.msra.mxu0 0.0
    %597 = vmatprep.subr.mxu0 0.0
    %598 = vmatpush1.msra.mxu0 0.0
    %599 = vmatprep.subr.mxu0 0.0
    %600 = vmatpush1.msra.mxu0 0.0
    %601 = vmatprep.subr.mxu0 0.0
    %602 = vmatpush1.msra.mxu0 0.0
    %603 = vmatprep.subr.mxu0 0.0
    %604 = vmatpush1.msra.mxu0 0.0
    %605 = vmatprep.subr.mxu0 0.0
    %606 = vmatpush1.msra.mxu0 0.0
    %607 = vmatprep.subr.mxu0 0.0
    %608 = vmatpush1.msra.mxu0 0.0
    %609 = vmatprep.subr.mxu0 0.0
    %610 = vmatpush1.msra.mxu0 0.0
    %611 = vmatprep.subr.mxu0 0.0
    %612 = vmatpush1.msra.mxu0 0.0
    %613 = vmatprep.subr.mxu0 0.0
    %614 = vmatpush1.msra.mxu0 0.0
    %615 = vmatprep.subr.mxu0 0.0
    %616 = vmatpush1.msra.mxu0 0.0
    %617 = vmatprep.subr.mxu0 0.0
    %618 = vmatpush1.msra.mxu0 0.0
    %619 = vmatprep.subr.mxu0 0.0
    %620 = vmatpush1.msra.mxu0 0.0
    %621 = vmatprep.subr.mxu0 0.0
    %622 = vmatpush1.msra.mxu0 0.0
    %623 = vmatprep.subr.mxu0 0.0
    %624 = vmatpush1.msra.mxu0 0.0
    %625 = vmatprep.subr.mxu0 0.0
    %626 = vmatpush1.msra.mxu0 0.0
    %627 = vmatprep.subr.mxu0 0.0
    %628 = vmatpush1.msra.mxu0 0.0
    %629 = vmatprep.subr.mxu0 0.0
    %630 = vmatpush1.msra.mxu0 0.0
    %631 = vmatprep.subr.mxu0 0.0
    %632 = vmatpush1.msra.mxu0 0.0
    %633 = vmatprep.subr.mxu0 0.0
    %634 = vmatpush1.msra.mxu0 0.0
    %635 = vmatprep.subr.mxu0 0.0
    %636 = vmatpush1.msra.mxu0 0.0
    %637 = vmatprep.subr.mxu0 0.0
    %638 = vmatpush1.msra.mxu0 0.0
    %639 = vmatprep.subr.mxu0 0.0
    %640 = vmatpush1.msra.mxu0 0.0
    %641 = vmatprep.subr.mxu0 0.0
    %642 = vmatpush1.msra.mxu0 0.0
    %643 = vmatprep.mubr.f32.mxu0 0.0
    %644 = vmatmul.mubr.f32.gmra.mrb[0].mxu0 %v571
    %v645 = vpop.f32.mrb[0].mxu0
    %v646 = vadd.f32 0.0, %v645
    %v647 = vpop.f32.mrb[0].mxu0
    %v648 = vadd.f32 0.0, %v647
    %649 = vdwg.mxu0
    %v650 = vadd.f32 %v551, %v646
    %v651 = vadd.f32 %v552, %v648
    %s652 = scalar_lea.vmem %s4, 384
    %v653 = vld [vmem:[%s652] sm:$0xff]
    %v654 = vld [vmem:[%s652 + $0x8] sm:$0xff]
    %v655 = vld [vmem:[%s652 + $0x10] sm:$0xff]
    %v656 = vld [vmem:[%s652 + $0x18] sm:$0xff]
    %v657 = vld [vmem:[%s652 + $0x20] sm:$0xff]
    %v658 = vld [vmem:[%s652 + $0x28] sm:$0xff]
    %v659 = vld [vmem:[%s652 + $0x30] sm:$0xff]
    %v660 = vld [vmem:[%s652 + $0x38] sm:$0xff]
    %v661 = vld [vmem:[%s652 + $0x40] sm:$0xff]
    %v662 = vld [vmem:[%s652 + $0x48] sm:$0xff]
    %v663 = vld [vmem:[%s652 + $0x50] sm:$0xff]
    %v664 = vld [vmem:[%s652 + $0x58] sm:$0xff]
    %v665 = vld [vmem:[%s652 + $0x60] sm:$0xff]
    %v666 = vld [vmem:[%s652 + $0x68] sm:$0xff]
    %v667 = vld [vmem:[%s652 + $0x70] sm:$0xf]
    %v668 = vld [vmem:[%s652 + $0x78] sm:$0xf]
    %v669 = vrot.slane %v353, 3
    %v670 = vsel %vm151, %v669, 0
    %v673 = vsel %vm155, %v667, 0
    %v676 = vsel %vm155, %v668, 0
    %678 = vmatprep.subr.mxu0 %v654
    %679 = vmatpush1.msra.mxu0 %v653
    %680 = vmatprep.subr.mxu0 %v656
    %681 = vmatpush1.msra.mxu0 %v655
    %682 = vmatprep.subr.mxu0 %v658
    %683 = vmatpush1.msra.mxu0 %v657
    %684 = vmatprep.subr.mxu0 %v660
    %685 = vmatpush1.msra.mxu0 %v659
    %686 = vmatprep.subr.mxu0 %v662
    %687 = vmatpush1.msra.mxu0 %v661
    %688 = vmatprep.subr.mxu0 %v664
    %689 = vmatpush1.msra.mxu0 %v663
    %690 = vmatprep.subr.mxu0 %v666
    %691 = vmatpush1.msra.mxu0 %v665
    %692 = vmatprep.subr.mxu0 %v676
    %693 = vmatpush1.msra.mxu0 %v673
    %694 = vmatprep.subr.mxu0 0.0
    %695 = vmatpush1.msra.mxu0 0.0
    %696 = vmatprep.subr.mxu0 0.0
    %697 = vmatpush1.msra.mxu0 0.0
    %698 = vmatprep.subr.mxu0 0.0
    %699 = vmatpush1.msra.mxu0 0.0
    %700 = vmatprep.subr.mxu0 0.0
    %701 = vmatpush1.msra.mxu0 0.0
    %702 = vmatprep.subr.mxu0 0.0
    %703 = vmatpush1.msra.mxu0 0.0
    %704 = vmatprep.subr.mxu0 0.0
    %705 = vmatpush1.msra.mxu0 0.0
    %706 = vmatprep.subr.mxu0 0.0
    %707 = vmatpush1.msra.mxu0 0.0
    %708 = vmatprep.subr.mxu0 0.0
    %709 = vmatpush1.msra.mxu0 0.0
    %710 = vmatprep.subr.mxu0 0.0
    %711 = vmatpush1.msra.mxu0 0.0
    %712 = vmatprep.subr.mxu0 0.0
    %713 = vmatpush1.msra.mxu0 0.0
    %714 = vmatprep.subr.mxu0 0.0
    %715 = vmatpush1.msra.mxu0 0.0
    %716 = vmatprep.subr.mxu0 0.0
    %717 = vmatpush1.msra.mxu0 0.0
    %718 = vmatprep.subr.mxu0 0.0
    %719 = vmatpush1.msra.mxu0 0.0
    %720 = vmatprep.subr.mxu0 0.0
    %721 = vmatpush1.msra.mxu0 0.0
    %722 = vmatprep.subr.mxu0 0.0
    %723 = vmatpush1.msra.mxu0 0.0
    %724 = vmatprep.subr.mxu0 0.0
    %725 = vmatpush1.msra.mxu0 0.0
    %726 = vmatprep.subr.mxu0 0.0
    %727 = vmatpush1.msra.mxu0 0.0
    %728 = vmatprep.subr.mxu0 0.0
    %729 = vmatpush1.msra.mxu0 0.0
    %730 = vmatprep.subr.mxu0 0.0
    %731 = vmatpush1.msra.mxu0 0.0
    %732 = vmatprep.subr.mxu0 0.0
    %733 = vmatpush1.msra.mxu0 0.0
    %734 = vmatprep.subr.mxu0 0.0
    %735 = vmatpush1.msra.mxu0 0.0
    %736 = vmatprep.subr.mxu0 0.0
    %737 = vmatpush1.msra.mxu0 0.0
    %738 = vmatprep.subr.mxu0 0.0
    %739 = vmatpush1.msra.mxu0 0.0
    %740 = vmatprep.subr.mxu0 0.0
    %741 = vmatpush1.msra.mxu0 0.0
    %742 = vmatprep.mubr.f32.mxu0 0.0
    %743 = vmatmul.mubr.f32.gmra.mrb[0].mxu0 %v670
    %v744 = vpop.f32.mrb[0].mxu0
    %v745 = vadd.f32 0.0, %v744
    %v746 = vpop.f32.mrb[0].mxu0
    %v747 = vadd.f32 0.0, %v746
    %748 = vdwg.mxu0
    %v749 = vadd.f32 %v650, %v745
    %v750 = vadd.f32 %v651, %v747
    %s751 = scalar_lea.vmem %s4, 512
    %v752 = vld [vmem:[%s751] sm:$0xff]
    %v753 = vld [vmem:[%s751 + $0x8] sm:$0xff]
    %v754 = vld [vmem:[%s751 + $0x10] sm:$0xff]
    %v755 = vld [vmem:[%s751 + $0x18] sm:$0xff]
    %v756 = vld [vmem:[%s751 + $0x20] sm:$0xff]
    %v757 = vld [vmem:[%s751 + $0x28] sm:$0xff]
    %v758 = vld [vmem:[%s751 + $0x30] sm:$0xff]
    %v759 = vld [vmem:[%s751 + $0x38] sm:$0xff]
    %v760 = vld [vmem:[%s751 + $0x40] sm:$0xff]
    %v761 = vld [vmem:[%s751 + $0x48] sm:$0xff]
    %v762 = vld [vmem:[%s751 + $0x50] sm:$0xff]
    %v763 = vld [vmem:[%s751 + $0x58] sm:$0xff]
    %v764 = vld [vmem:[%s751 + $0x60] sm:$0xff]
    %v765 = vld [vmem:[%s751 + $0x68] sm:$0xff]
    %v766 = vld [vmem:[%s751 + $0x70] sm:$0xf]
    %v767 = vld [vmem:[%s751 + $0x78] sm:$0xf]
    %v768 = vrot.slane %v353, 4
    %v769 = vsel %vm151, %v768, 0
    %v772 = vsel %vm155, %v766, 0
    %v775 = vsel %vm155, %v767, 0
    %777 = vmatprep.subr.mxu0 %v753
    %778 = vmatpush1.msra.mxu0 %v752
    %779 = vmatprep.subr.mxu0 %v755
    %780 = vmatpush1.msra.mxu0 %v754
    %781 = vmatprep.subr.mxu0 %v757
    %782 = vmatpush1.msra.mxu0 %v756
    %783 = vmatprep.subr.mxu0 %v759
    %784 = vmatpush1.msra.mxu0 %v758
    %785 = vmatprep.subr.mxu0 %v761
    %786 = vmatpush1.msra.mxu0 %v760
    %787 = vmatprep.subr.mxu0 %v763
    %788 = vmatpush1.msra.mxu0 %v762
    %789 = vmatprep.subr.mxu0 %v765
    %790 = vmatpush1.msra.mxu0 %v764
    %791 = vmatprep.subr.mxu0 %v775
    %792 = vmatpush1.msra.mxu0 %v772
    %793 = vmatprep.subr.mxu0 0.0
    %794 = vmatpush1.msra.mxu0 0.0
    %795 = vmatprep.subr.mxu0 0.0
    %796 = vmatpush1.msra.mxu0 0.0
    %797 = vmatprep.subr.mxu0 0.0
    %798 = vmatpush1.msra.mxu0 0.0
    %799 = vmatprep.subr.mxu0 0.0
    %800 = vmatpush1.msra.mxu0 0.0
    %801 = vmatprep.subr.mxu0 0.0
    %802 = vmatpush1.msra.mxu0 0.0
    %803 = vmatprep.subr.mxu0 0.0
    %804 = vmatpush1.msra.mxu0 0.0
    %805 = vmatprep.subr.mxu0 0.0
    %806 = vmatpush1.msra.mxu0 0.0
    %807 = vmatprep.subr.mxu0 0.0
    %808 = vmatpush1.msra.mxu0 0.0
    %809 = vmatprep.subr.mxu0 0.0
    %810 = vmatpush1.msra.mxu0 0.0
    %811 = vmatprep.subr.mxu0 0.0
    %812 = vmatpush1.msra.mxu0 0.0
    %813 = vmatprep.subr.mxu0 0.0
    %814 = vmatpush1.msra.mxu0 0.0
    %815 = vmatprep.subr.mxu0 0.0
    %816 = vmatpush1.msra.mxu0 0.0
    %817 = vmatprep.subr.mxu0 0.0
    %818 = vmatpush1.msra.mxu0 0.0
    %819 = vmatprep.subr.mxu0 0.0
    %820 = vmatpush1.msra.mxu0 0.0
    %821 = vmatprep.subr.mxu0 0.0
    %822 = vmatpush1.msra.mxu0 0.0
    %823 = vmatprep.subr.mxu0 0.0
    %824 = vmatpush1.msra.mxu0 0.0
    %825 = vmatprep.subr.mxu0 0.0
    %826 = vmatpush1.msra.mxu0 0.0
    %827 = vmatprep.subr.mxu0 0.0
    %828 = vmatpush1.msra.mxu0 0.0
    %829 = vmatprep.subr.mxu0 0.0
    %830 = vmatpush1.msra.mxu0 0.0
    %831 = vmatprep.subr.mxu0 0.0
    %832 = vmatpush1.msra.mxu0 0.0
    %833 = vmatprep.subr.mxu0 0.0
    %834 = vmatpush1.msra.mxu0 0.0
    %835 = vmatprep.subr.mxu0 0.0
    %836 = vmatpush1.msra.mxu0 0.0
    %837 = vmatprep.subr.mxu0 0.0
    %838 = vmatpush1.msra.mxu0 0.0
    %839 = vmatprep.subr.mxu0 0.0
    %840 = vmatpush1.msra.mxu0 0.0
    %841 = vmatprep.mubr.f32.mxu0 0.0
    %842 = vmatmul.mubr.f32.gmra.mrb[0].mxu0 %v769
    %v843 = vpop.f32.mrb[0].mxu0
    %v844 = vadd.f32 0.0, %v843
    %v845 = vpop.f32.mrb[0].mxu0
    %v846 = vadd.f32 0.0, %v845
    %847 = vdwg.mxu0
    %v848 = vadd.f32 %v749, %v844
    %v849 = vadd.f32 %v750, %v846
    %s850 = scalar_lea.vmem %s4, 640
    %v851 = vld [vmem:[%s850] sm:$0xff]
    %v852 = vld [vmem:[%s850 + $0x8] sm:$0xff]
    %v853 = vld [vmem:[%s850 + $0x10] sm:$0xff]
    %v854 = vld [vmem:[%s850 + $0x18] sm:$0xff]
    %v855 = vld [vmem:[%s850 + $0x20] sm:$0xff]
    %v856 = vld [vmem:[%s850 + $0x28] sm:$0xff]
    %v857 = vld [vmem:[%s850 + $0x30] sm:$0xff]
    %v858 = vld [vmem:[%s850 + $0x38] sm:$0xff]
    %v859 = vld [vmem:[%s850 + $0x40] sm:$0xff]
    %v860 = vld [vmem:[%s850 + $0x48] sm:$0xff]
    %v861 = vld [vmem:[%s850 + $0x50] sm:$0xff]
    %v862 = vld [vmem:[%s850 + $0x58] sm:$0xff]
    %v863 = vld [vmem:[%s850 + $0x60] sm:$0xff]
    %v864 = vld [vmem:[%s850 + $0x68] sm:$0xff]
    %v865 = vld [vmem:[%s850 + $0x70] sm:$0xf]
    %v866 = vld [vmem:[%s850 + $0x78] sm:$0xf]
    %v867 = vrot.slane %v353, 5
    %v868 = vsel %vm151, %v867, 0
    %v871 = vsel %vm155, %v865, 0
    %v874 = vsel %vm155, %v866, 0
    %876 = vmatprep.subr.mxu0 %v852
    %877 = vmatpush1.msra.mxu0 %v851
    %878 = vmatprep.subr.mxu0 %v854
    %879 = vmatpush1.msra.mxu0 %v853
    %880 = vmatprep.subr.mxu0 %v856
    %881 = vmatpush1.msra.mxu0 %v855
    %882 = vmatprep.subr.mxu0 %v858
    %883 = vmatpush1.msra.mxu0 %v857
    %884 = vmatprep.subr.mxu0 %v860
    %885 = vmatpush1.msra.mxu0 %v859
    %886 = vmatprep.subr.mxu0 %v862
    %887 = vmatpush1.msra.mxu0 %v861
    %888 = vmatprep.subr.mxu0 %v864
    %889 = vmatpush1.msra.mxu0 %v863
    %890 = vmatprep.subr.mxu0 %v874
    %891 = vmatpush1.msra.mxu0 %v871
    %892 = vmatprep.subr.mxu0 0.0
    %893 = vmatpush1.msra.mxu0 0.0
    %894 = vmatprep.subr.mxu0 0.0
    %895 = vmatpush1.msra.mxu0 0.0
    %896 = vmatprep.subr.mxu0 0.0
    %897 = vmatpush1.msra.mxu0 0.0
    %898 = vmatprep.subr.mxu0 0.0
    %899 = vmatpush1.msra.mxu0 0.0
    %900 = vmatprep.subr.mxu0 0.0
    %901 = vmatpush1.msra.mxu0 0.0
    %902 = vmatprep.subr.mxu0 0.0
    %903 = vmatpush1.msra.mxu0 0.0
    %904 = vmatprep.subr.mxu0 0.0
    %905 = vmatpush1.msra.mxu0 0.0
    %906 = vmatprep.subr.mxu0 0.0
    %907 = vmatpush1.msra.mxu0 0.0
    %908 = vmatprep.subr.mxu0 0.0
    %909 = vmatpush1.msra.mxu0 0.0
    %910 = vmatprep.subr.mxu0 0.0
    %911 = vmatpush1.msra.mxu0 0.0
    %912 = vmatprep.subr.mxu0 0.0
    %913 = vmatpush1.msra.mxu0 0.0
    %914 = vmatprep.subr.mxu0 0.0
    %915 = vmatpush1.msra.mxu0 0.0
    %916 = vmatprep.subr.mxu0 0.0
    %917 = vmatpush1.msra.mxu0 0.0
    %918 = vmatprep.subr.mxu0 0.0
    %919 = vmatpush1.msra.mxu0 0.0
    %920 = vmatprep.subr.mxu0 0.0
    %921 = vmatpush1.msra.mxu0 0.0
    %922 = vmatprep.subr.mxu0 0.0
    %923 = vmatpush1.msra.mxu0 0.0
    %924 = vmatprep.subr.mxu0 0.0
    %925 = vmatpush1.msra.mxu0 0.0
    %926 = vmatprep.subr.mxu0 0.0
    %927 = vmatpush1.msra.mxu0 0.0
    %928 = vmatprep.subr.mxu0 0.0
    %929 = vmatpush1.msra.mxu0 0.0
    %930 = vmatprep.subr.mxu0 0.0
    %931 = vmatpush1.msra.mxu0 0.0
    %932 = vmatprep.subr.mxu0 0.0
    %933 = vmatpush1.msra.mxu0 0.0
    %934 = vmatprep.subr.mxu0 0.0
    %935 = vmatpush1.msra.mxu0 0.0
    %936 = vmatprep.subr.mxu0 0.0
    %937 = vmatpush1.msra.mxu0 0.0
    %938 = vmatprep.subr.mxu0 0.0
    %939 = vmatpush1.msra.mxu0 0.0
    %940 = vmatprep.mubr.f32.mxu0 0.0
    %941 = vmatmul.mubr.f32.gmra.mrb[0].mxu0 %v868
    %v942 = vpop.f32.mrb[0].mxu0
    %v943 = vadd.f32 0.0, %v942
    %v944 = vpop.f32.mrb[0].mxu0
    %v945 = vadd.f32 0.0, %v944
    %946 = vdwg.mxu0
    %v947 = vadd.f32 %v848, %v943
    %v948 = vadd.f32 %v849, %v945
    %s949 = scalar_lea.vmem %s4, 768
    %v950 = vld [vmem:[%s949] sm:$0xff]
    %v951 = vld [vmem:[%s949 + $0x8] sm:$0xff]
    %v952 = vld [vmem:[%s949 + $0x10] sm:$0xff]
    %v953 = vld [vmem:[%s949 + $0x18] sm:$0xff]
    %v954 = vld [vmem:[%s949 + $0x20] sm:$0xff]
    %v955 = vld [vmem:[%s949 + $0x28] sm:$0xff]
    %v956 = vld [vmem:[%s949 + $0x30] sm:$0xff]
    %v957 = vld [vmem:[%s949 + $0x38] sm:$0xff]
    %v958 = vld [vmem:[%s949 + $0x40] sm:$0xff]
    %v959 = vld [vmem:[%s949 + $0x48] sm:$0xff]
    %v960 = vld [vmem:[%s949 + $0x50] sm:$0xff]
    %v961 = vld [vmem:[%s949 + $0x58] sm:$0xff]
    %v962 = vld [vmem:[%s949 + $0x60] sm:$0xff]
    %v963 = vld [vmem:[%s949 + $0x68] sm:$0xff]
    %v964 = vld [vmem:[%s949 + $0x70] sm:$0xf]
    %v965 = vld [vmem:[%s949 + $0x78] sm:$0xf]
    %v966 = vrot.slane %v353, 6
    %v967 = vsel %vm151, %v966, 0
    %v970 = vsel %vm155, %v964, 0
    %v973 = vsel %vm155, %v965, 0
    %975 = vmatprep.subr.mxu0 %v951
    %976 = vmatpush1.msra.mxu0 %v950
    %977 = vmatprep.subr.mxu0 %v953
    %978 = vmatpush1.msra.mxu0 %v952
    %979 = vmatprep.subr.mxu0 %v955
    %980 = vmatpush1.msra.mxu0 %v954
    %981 = vmatprep.subr.mxu0 %v957
    %982 = vmatpush1.msra.mxu0 %v956
    %983 = vmatprep.subr.mxu0 %v959
    %984 = vmatpush1.msra.mxu0 %v958
    %985 = vmatprep.subr.mxu0 %v961
    %986 = vmatpush1.msra.mxu0 %v960
    %987 = vmatprep.subr.mxu0 %v963
    %988 = vmatpush1.msra.mxu0 %v962
    %989 = vmatprep.subr.mxu0 %v973
    %990 = vmatpush1.msra.mxu0 %v970
    %991 = vmatprep.subr.mxu0 0.0
    %992 = vmatpush1.msra.mxu0 0.0
    %993 = vmatprep.subr.mxu0 0.0
    %994 = vmatpush1.msra.mxu0 0.0
    %995 = vmatprep.subr.mxu0 0.0
    %996 = vmatpush1.msra.mxu0 0.0
    %997 = vmatprep.subr.mxu0 0.0
    %998 = vmatpush1.msra.mxu0 0.0
    %999 = vmatprep.subr.mxu0 0.0
    %1000 = vmatpush1.msra.mxu0 0.0
    %1001 = vmatprep.subr.mxu0 0.0
    %1002 = vmatpush1.msra.mxu0 0.0
    %1003 = vmatprep.subr.mxu0 0.0
    %1004 = vmatpush1.msra.mxu0 0.0
    %1005 = vmatprep.subr.mxu0 0.0
    %1006 = vmatpush1.msra.mxu0 0.0
    %1007 = vmatprep.subr.mxu0 0.0
    %1008 = vmatpush1.msra.mxu0 0.0
    %1009 = vmatprep.subr.mxu0 0.0
    %1010 = vmatpush1.msra.mxu0 0.0
    %1011 = vmatprep.subr.mxu0 0.0
    %1012 = vmatpush1.msra.mxu0 0.0
    %1013 = vmatprep.subr.mxu0 0.0
    %1014 = vmatpush1.msra.mxu0 0.0
    %1015 = vmatprep.subr.mxu0 0.0
    %1016 = vmatpush1.msra.mxu0 0.0
    %1017 = vmatprep.subr.mxu0 0.0
    %1018 = vmatpush1.msra.mxu0 0.0
    %1019 = vmatprep.subr.mxu0 0.0
    %1020 = vmatpush1.msra.mxu0 0.0
    %1021 = vmatprep.subr.mxu0 0.0
    %1022 = vmatpush1.msra.mxu0 0.0
    %1023 = vmatprep.subr.mxu0 0.0
    %1024 = vmatpush1.msra.mxu0 0.0
    %1025 = vmatprep.subr.mxu0 0.0
    %1026 = vmatpush1.msra.mxu0 0.0
    %1027 = vmatprep.subr.mxu0 0.0
    %1028 = vmatpush1.msra.mxu0 0.0
    %1029 = vmatprep.subr.mxu0 0.0
    %1030 = vmatpush1.msra.mxu0 0.0
    %1031 = vmatprep.subr.mxu0 0.0
    %1032 = vmatpush1.msra.mxu0 0.0
    %1033 = vmatprep.subr.mxu0 0.0
    %1034 = vmatpush1.msra.mxu0 0.0
    %1035 = vmatprep.subr.mxu0 0.0
    %1036 = vmatpush1.msra.mxu0 0.0
    %1037 = vmatprep.subr.mxu0 0.0
    %1038 = vmatpush1.msra.mxu0 0.0
    %1039 = vmatprep.mubr.f32.mxu0 0.0
    %1040 = vmatmul.mubr.f32.gmra.mrb[0].mxu0 %v967
    %v1041 = vpop.f32.mrb[0].mxu0
    %v1042 = vadd.f32 0.0, %v1041
    %v1043 = vpop.f32.mrb[0].mxu0
    %v1044 = vadd.f32 0.0, %v1043
    %1045 = vdwg.mxu0
    %v1046 = vadd.f32 %v947, %v1042
    %v1047 = vadd.f32 %v948, %v1044
    %s1048 = scalar_lea.vmem %s4, 896
    %v1049 = vld [vmem:[%s1048] sm:$0xff]
    %v1050 = vld [vmem:[%s1048 + $0x8] sm:$0xff]
    %v1051 = vld [vmem:[%s1048 + $0x10] sm:$0xff]
    %v1052 = vld [vmem:[%s1048 + $0x18] sm:$0xff]
    %v1053 = vld [vmem:[%s1048 + $0x20] sm:$0xff]
    %v1054 = vld [vmem:[%s1048 + $0x28] sm:$0xff]
    %v1055 = vld [vmem:[%s1048 + $0x30] sm:$0xff]
    %v1056 = vld [vmem:[%s1048 + $0x38] sm:$0xff]
    %v1057 = vld [vmem:[%s1048 + $0x40] sm:$0xff]
    %v1058 = vld [vmem:[%s1048 + $0x48] sm:$0xff]
    %v1059 = vld [vmem:[%s1048 + $0x50] sm:$0xff]
    %v1060 = vld [vmem:[%s1048 + $0x58] sm:$0xff]
    %v1061 = vld [vmem:[%s1048 + $0x60] sm:$0xff]
    %v1062 = vld [vmem:[%s1048 + $0x68] sm:$0xff]
    %v1063 = vld [vmem:[%s1048 + $0x70] sm:$0xf]
    %v1064 = vld [vmem:[%s1048 + $0x78] sm:$0xf]
    %v1065 = vrot.slane %v353, 7
    %v1066 = vsel %vm151, %v1065, 0
    %v1069 = vsel %vm155, %v1063, 0
    %v1072 = vsel %vm155, %v1064, 0
    %1074 = vmatprep.subr.mxu0 %v1050
    %1075 = vmatpush1.msra.mxu0 %v1049
    %1076 = vmatprep.subr.mxu0 %v1052
    %1077 = vmatpush1.msra.mxu0 %v1051
    %1078 = vmatprep.subr.mxu0 %v1054
    %1079 = vmatpush1.msra.mxu0 %v1053
    %1080 = vmatprep.subr.mxu0 %v1056
    %1081 = vmatpush1.msra.mxu0 %v1055
    %1082 = vmatprep.subr.mxu0 %v1058
    %1083 = vmatpush1.msra.mxu0 %v1057
    %1084 = vmatprep.subr.mxu0 %v1060
    %1085 = vmatpush1.msra.mxu0 %v1059
    %1086 = vmatprep.subr.mxu0 %v1062
    %1087 = vmatpush1.msra.mxu0 %v1061
    %1088 = vmatprep.subr.mxu0 %v1072
    %1089 = vmatpush1.msra.mxu0 %v1069
    %1090 = vmatprep.subr.mxu0 0.0
    %1091 = vmatpush1.msra.mxu0 0.0
    %1092 = vmatprep.subr.mxu0 0.0
    %1093 = vmatpush1.msra.mxu0 0.0
    %1094 = vmatprep.subr.mxu0 0.0
    %1095 = vmatpush1.msra.mxu0 0.0
    %1096 = vmatprep.subr.mxu0 0.0
    %1097 = vmatpush1.msra.mxu0 0.0
    %1098 = vmatprep.subr.mxu0 0.0
    %1099 = vmatpush1.msra.mxu0 0.0
    %1100 = vmatprep.subr.mxu0 0.0
    %1101 = vmatpush1.msra.mxu0 0.0
    %1102 = vmatprep.subr.mxu0 0.0
    %1103 = vmatpush1.msra.mxu0 0.0
    %1104 = vmatprep.subr.mxu0 0.0
    %1105 = vmatpush1.msra.mxu0 0.0
    %1106 = vmatprep.subr.mxu0 0.0
    %1107 = vmatpush1.msra.mxu0 0.0
    %1108 = vmatprep.subr.mxu0 0.0
    %1109 = vmatpush1.msra.mxu0 0.0
    %1110 = vmatprep.subr.mxu0 0.0
    %1111 = vmatpush1.msra.mxu0 0.0
    %1112 = vmatprep.subr.mxu0 0.0
    %1113 = vmatpush1.msra.mxu0 0.0
    %1114 = vmatprep.subr.mxu0 0.0
    %1115 = vmatpush1.msra.mxu0 0.0
    %1116 = vmatprep.subr.mxu0 0.0
    %1117 = vmatpush1.msra.mxu0 0.0
    %1118 = vmatprep.subr.mxu0 0.0
    %1119 = vmatpush1.msra.mxu0 0.0
    %1120 = vmatprep.subr.mxu0 0.0
    %1121 = vmatpush1.msra.mxu0 0.0
    %1122 = vmatprep.subr.mxu0 0.0
    %1123 = vmatpush1.msra.mxu0 0.0
    %1124 = vmatprep.subr.mxu0 0.0
    %1125 = vmatpush1.msra.mxu0 0.0
    %1126 = vmatprep.subr.mxu0 0.0
    %1127 = vmatpush1.msra.mxu0 0.0
    %1128 = vmatprep.subr.mxu0 0.0
    %1129 = vmatpush1.msra.mxu0 0.0
    %1130 = vmatprep.subr.mxu0 0.0
    %1131 = vmatpush1.msra.mxu0 0.0
    %1132 = vmatprep.subr.mxu0 0.0
    %1133 = vmatpush1.msra.mxu0 0.0
    %1134 = vmatprep.subr.mxu0 0.0
    %1135 = vmatpush1.msra.mxu0 0.0
    %1136 = vmatprep.subr.mxu0 0.0
    %1137 = vmatpush1.msra.mxu0 0.0
    %1138 = vmatprep.mubr.f32.mxu0 0.0
    %1139 = vmatmul.mubr.f32.gmra.mrb[0].mxu0 %v1066
    %v1140 = vpop.f32.mrb[0].mxu0
    %v1141 = vadd.f32 0.0, %v1140
    %v1142 = vpop.f32.mrb[0].mxu0
    %v1143 = vadd.f32 0.0, %v1142
    %1144 = vdwg.mxu0
    %v1145 = vadd.f32 %v1046, %v1141
    %v1146 = vadd.f32 %v1047, %v1143
    %v1147 = vlaneseq
    %v1148 = vand.u32 %v1147, 127
    %v1149 = vadd.s32 %v1148, 128
    %v1150 = vlaneseq
    %v1151 = vshrl.u32 %v1150, 7
    %v1152 = vmul.u32 %v1151, 30
    %v1153 = vsub.s32 %v1148, %v1152
    %v1154 = vsub.s32 %v1149, %v1152
    %vm1155 = vcmp.ge.s32.totalorder %v1153, 0
    %vm1156 = vcmp.ge.s32.totalorder %v1154, 0
    %vm1157 = vcmp.lt.s32.totalorder %v1153, 30
    %vm1158 = vcmp.lt.s32.totalorder %v1154, 30
    %vm1159 = vmand %vm1155, %vm1157
    %vm1160 = vmand %vm1156, %vm1158
    %v1161 = vlaneseq
    %v1162 = vshrl.u32 %v1161, 7
    %v1163 = vsub.s32 0, %v1162
    %v1164 = vrot.slane %v1145, %v1163
    %v1165 = vlaneseq
    %v1166 = vshrl.u32 %v1165, 7
    %v1167 = vsub.s32 0, %v1166
    %v1168 = vrot.slane %v1146, %v1167
    %v1169 = vsel %vm1159, %v1164, 0.0
    %v1170 = vsel %vm1160, %v1168, 0.0
    %v1171 = vlaneseq
    %v1172 = vshrl.u32 %v1171, 7
    %v1173 = vsub.s32 1, %v1172
    %v1174 = vrot.slane %v354, %v1173
    %v1175 = vlaneseq
    %v1176 = vshrl.u32 %v1175, 7
    %v1177 = vsub.s32 1, %v1176
    %v1178 = vrot.slane %v355, %v1177
    %v1179 = vmul.f32 %v1169, %v1174
    %v1180 = vmul.f32 %v1170, %v1178
    %vm1181 = vcmask 916480
    %v1182 = vsel %vm1181, %v1180, 0.0
    %v1183 = vadd.f32 %v1179, %v1182
    %1184 = vadd.xlane.f32.xlu0 %v1183
    %v1185 = vpop.xlane.xlu0 %1184
    %s1186 = sld [smem:[#allocation2 + $0x4]]
    %v1187 = vstv %s1186
    %v1188 = vadd.f32 %v1185, %v1187
    %v1189 = vmax.f32 %v1188, 0.0
    %v1190 = vlaneseq
    %v1191 = vshrl.u32 %v1190, 7
    %v1192 = vsub.s32 2, %v1191
    %v1193 = vrot.slane %v354, %v1192
    %v1194 = vlaneseq
    %v1195 = vshrl.u32 %v1194, 7
    %v1196 = vsub.s32 2, %v1195
    %v1197 = vrot.slane %v355, %v1196
    %v1198 = vmul.f32 %v1189, %v1193
    %v1199 = vmul.f32 %v1189, %v1197
    %v1200 = vlaneseq
    %v1201 = vshrl.u32 %v1200, 7
    %v1202 = vsub.s32 3, %v1201
    %v1203 = vrot.slane %v354, %v1202
    %v1204 = vlaneseq
    %v1205 = vshrl.u32 %v1204, 7
    %v1206 = vsub.s32 3, %v1205
    %v1207 = vrot.slane %v355, %v1206
    %v1208 = vadd.f32 %v1203, %v1198
    %v1209 = vadd.f32 %v1207, %v1199
    %v1210 = vmul.f32 %v1208, 3.0
    %v1211 = vmul.f32 %v1209, 3.0
    %v1212 = vxor.u32 %v1210, 2147483648
    %v1213 = vxor.u32 %v1211, 2147483648
    %v1214 = vmul.f32 %v1212, 1.442695
    %v1215 = vpow.pop %v1214
    %v1216 = vmul.f32 %v1213, 1.442695
    %v1217 = vpow.pop %v1216
    %v1218 = vadd.f32 %v1215, 1.0
    %v1219 = vadd.f32 %v1217, 1.0
    %v1220 = vrcp.pop %v1218
    %v1221 = vmul.f32 1.0, %v1220
    %v1222 = vrcp.pop %v1219
    %v1223 = vmul.f32 1.0, %v1222
    %v1224 = vmul.f32 %v1169, %v1221
    %v1225 = vmul.f32 %v1170, %v1223
    %v1226 = vsel %vm1159, %v1224, -inf
    %v1227 = vsel %vm1160, %v1225, -inf
    %v1228 = vsel %vm1181, %v1227, -inf
    %v1229 = vmax.f32 %v1226, %v1228
    %1230 = vmax.xlane.f32.xlu0 %v1229
    %v1231 = vpop.xlane.xlu0 %1230
    %v1232 = vsel %vm1181, %v1225, 0.0
    %v1233 = vadd.f32 %v1224, %v1232
    %1234 = vadd.xlane.f32.xlu0 %v1233
    %v1235 = vpop.xlane.xlu0 %1234
    %v1236 = vmul.f32 %v1235, 0.033333335
    %s1237 = sld [smem:[#allocation2 + $0x5]]
    %v1238 = vstv %s1237
    %v1239 = vmul.f32 %v1231, %v1238
    %s1240 = sld [smem:[#allocation2 + $0x6]]
    %v1241 = vstv %s1240
    %v1242 = vmul.f32 %v1236, %v1241
    %v1243 = vadd.f32 %v1239, %v1242
    %s1244 = sld [smem:[#allocation2 + $0x7]]
    %v1245 = vstv %s1244
    %v1246 = vmul.f32 %v1243, %v1245
    %s1247 = sld [smem:[#allocation2 + $0x8]]
    %v1248 = vstv %s1247
    %v1249 = vadd.f32 %v1246, %v1248
    %v1250 = vxor.u32 %v1249, 2147483648
    %v1251 = vmul.f32 %v1250, 1.442695
    %v1252 = vpow.pop %v1251
    %v1253 = vadd.f32 %v1252, 1.0
    %v1254 = vrcp.pop %v1253
    %v1255 = vmul.f32 1.0, %v1254
    %v1256 = vmul.f32 %v1224, %v1255
    %v1257 = vmul.f32 %v1225, %v1255
    %vm1258 = vcmp.ge.f32.partialorder %v1256, 0.0
    %vm1259 = vcmp.ge.f32.partialorder %v1257, 0.0
    %v1260 = vmul.f32 %v1256, 0.01
    %v1261 = vmul.f32 %v1257, 0.01
    %v1262 = vsel %vm1258, %v1256, %v1260
    %v1263 = vsel %vm1259, %v1257, %v1261
    %v1264 = vld [vmem:[%s6] sm:$0xff]
    %v1265 = vld [vmem:[%s6 + $0x8] sm:$0xff]
    %v1266 = vld [vmem:[%s6 + $0x10] sm:$0xff]
    %v1267 = vld [vmem:[%s6 + $0x18] sm:$0xff]
    %v1268 = vld [vmem:[%s6 + $0x20] sm:$0xff]
    %v1269 = vld [vmem:[%s6 + $0x28] sm:$0xff]
    %v1270 = vld [vmem:[%s6 + $0x30] sm:$0xff]
    %v1271 = vld [vmem:[%s6 + $0x38] sm:$0xff]
    %v1272 = vld [vmem:[%s6 + $0x40] sm:$0xff]
    %v1273 = vld [vmem:[%s6 + $0x48] sm:$0xff]
    %v1274 = vld [vmem:[%s6 + $0x50] sm:$0xff]
    %v1275 = vld [vmem:[%s6 + $0x58] sm:$0xff]
    %v1276 = vld [vmem:[%s6 + $0x60] sm:$0xff]
    %v1277 = vld [vmem:[%s6 + $0x68] sm:$0xff]
    %v1278 = vld [vmem:[%s6 + $0x70] sm:$0xff]
    %v1279 = vld [vmem:[%s6 + $0x78] sm:$0xff]
    %v1280 = vld [vmem:[%s6 + $0x80] sm:$0xff]
    %v1281 = vld [vmem:[%s6 + $0x88] sm:$0xff]
    %v1282 = vld [vmem:[%s6 + $0x90] sm:$0xff]
    %v1283 = vld [vmem:[%s6 + $0x98] sm:$0xff]
    %v1284 = vld [vmem:[%s6 + $0xa0] sm:$0xff]
    %v1285 = vld [vmem:[%s6 + $0xa8] sm:$0xff]
    %v1286 = vld [vmem:[%s6 + $0xb0] sm:$0xff]
    %v1287 = vld [vmem:[%s6 + $0xb8] sm:$0xff]
    %v1288 = vld [vmem:[%s6 + $0xc0] sm:$0xff]
    %v1289 = vld [vmem:[%s6 + $0xc8] sm:$0xff]
    %v1290 = vld [vmem:[%s6 + $0xd0] sm:$0xff]
    %v1291 = vld [vmem:[%s6 + $0xd8] sm:$0xff]
    %v1292 = vld [vmem:[%s6 + $0xe0] sm:$0xff]
    %v1293 = vld [vmem:[%s6 + $0xe8] sm:$0xff]
    %v1295 = vsel %vm1181, %v1263, 0
    %1297 = vmatprep.subr.mxu0 0.0
    %1298 = vmatpush1.msra.mxu0 %v1264
    %1299 = vmatprep.subr.mxu0 0.0
    %1300 = vmatpush1.msra.mxu0 %v1265
    %1301 = vmatprep.subr.mxu0 0.0
    %1302 = vmatpush1.msra.mxu0 %v1266
    %1303 = vmatprep.subr.mxu0 0.0
    %1304 = vmatpush1.msra.mxu0 %v1267
    %1305 = vmatprep.subr.mxu0 0.0
    %1306 = vmatpush1.msra.mxu0 %v1268
    %1307 = vmatprep.subr.mxu0 0.0
    %1308 = vmatpush1.msra.mxu0 %v1269
    %1309 = vmatprep.subr.mxu0 0.0
    %1310 = vmatpush1.msra.mxu0 %v1270
    %1311 = vmatprep.subr.mxu0 0.0
    %1312 = vmatpush1.msra.mxu0 %v1271
    %1313 = vmatprep.subr.mxu0 0.0
    %1314 = vmatpush1.msra.mxu0 %v1272
    %1315 = vmatprep.subr.mxu0 0.0
    %1316 = vmatpush1.msra.mxu0 %v1273
    %1317 = vmatprep.subr.mxu0 0.0
    %1318 = vmatpush1.msra.mxu0 %v1274
    %1319 = vmatprep.subr.mxu0 0.0
    %1320 = vmatpush1.msra.mxu0 %v1275
    %1321 = vmatprep.subr.mxu0 0.0
    %1322 = vmatpush1.msra.mxu0 %v1276
    %1323 = vmatprep.subr.mxu0 0.0
    %1324 = vmatpush1.msra.mxu0 %v1277
    %1325 = vmatprep.subr.mxu0 0.0
    %1326 = vmatpush1.msra.mxu0 %v1278
    %1327 = vmatprep.subr.mxu0 0.0
    %1328 = vmatpush1.msra.mxu0 %v1279
    %1329 = vmatprep.subr.mxu0 0.0
    %1330 = vmatpush1.msra.mxu0 %v1280
    %1331 = vmatprep.subr.mxu0 0.0
    %1332 = vmatpush1.msra.mxu0 %v1281
    %1333 = vmatprep.subr.mxu0 0.0
    %1334 = vmatpush1.msra.mxu0 %v1282
    %1335 = vmatprep.subr.mxu0 0.0
    %1336 = vmatpush1.msra.mxu0 %v1283
    %1337 = vmatprep.subr.mxu0 0.0
    %1338 = vmatpush1.msra.mxu0 %v1284
    %1339 = vmatprep.subr.mxu0 0.0
    %1340 = vmatpush1.msra.mxu0 %v1285
    %1341 = vmatprep.subr.mxu0 0.0
    %1342 = vmatpush1.msra.mxu0 %v1286
    %1343 = vmatprep.subr.mxu0 0.0
    %1344 = vmatpush1.msra.mxu0 %v1287
    %1345 = vmatprep.subr.mxu0 0.0
    %1346 = vmatpush1.msra.mxu0 %v1288
    %1347 = vmatprep.subr.mxu0 0.0
    %1348 = vmatpush1.msra.mxu0 %v1289
    %1349 = vmatprep.subr.mxu0 0.0
    %1350 = vmatpush1.msra.mxu0 %v1290
    %1351 = vmatprep.subr.mxu0 0.0
    %1352 = vmatpush1.msra.mxu0 %v1291
    %1353 = vmatprep.subr.mxu0 0.0
    %1354 = vmatpush1.msra.mxu0 %v1292
    %1355 = vmatprep.subr.mxu0 0.0
    %1356 = vmatpush1.msra.mxu0 %v1293
    %1357 = vmatprep.subr.mxu0 0.0
    %1358 = vmatpush1.msra.mxu0 0.0
    %1359 = vmatprep.subr.mxu0 0.0
    %1360 = vmatpush1.msra.mxu0 0.0
    %1361 = vmatprep.mubr.f32.mxu0 %v1295
    %1362 = vmatmul.mubr.f32.gmra.mrb[0].mxu0 %v1262
    %v1363 = vpop.f32.mrb[0].mxu0
    %v1364 = vadd.f32 0.0, %v1363
    %v1365 = vpop.f32.mrb[0].mxu0
    %1366 = vdwg.mxu0
    %vm1367 = vcmask 244736
    %1368 = vst.msk [vmem:[#allocation5] sm:$0xff] %vm1367, %v1364
    // Predicated region
    $region38: #{ginn3_forward.1} parent=1 // pred_check
      _
    $region39: #{ginn3_forward.1} parent=1 // pred_check_branch
      %1370 = sbr.rel (0) target = $region41
    $region40: #{ginn3_forward.1} parent=1 // pred_region
      %s1372 = ssub.s32 128, 128
      %1373 = vsyncadd [#allocation3], %s1372
      %s1375 = sshll.u32 [#allocation5], 4
      %s1376 = int_to_ptr.vmem [resolvable:$true] %s1375
      %1378 = dma.vmem_to_hbm [thread:$0]  %s1376, 128, %s8, [#allocation3]
    $region41: #{ginn3_forward.1} parent=1 // pred_fallthru
      _
    // Predicated region
    $region42: #{ginn3_forward.1} parent=1 // pred_check
      _
    $region43: #{ginn3_forward.1} parent=1 // pred_check_branch
      %1380 = sbr.rel (0) target = $region45
    $region44: #{ginn3_forward.1} parent=1 // pred_region
      %1381 = dma.done [#allocation3], 128
    $region45: #{ginn3_forward.1} parent=1 // pred_fallthru
      _
    %1382 = vsyncpa [#allocation3], 1
    %1383 = vsyncpa [#allocation4], 1

</llo_original>
